<compile_context>
chip_gen: v6e
topology: v6e:2x2x1
jax: 0.10.0
libtpu: 0.0.40
codegen_flags: <defaults>
</compile_context>

<pallas_src>
import functools

import jax
import jax.numpy as jnp
from jax.experimental import pallas as pl
from jax.experimental.pallas import tpu as pltpu

# ---- static, per-device configuration (resolved once at import time) -------
def _device_kind():
    try:
        return jax.devices()[0].device_kind.lower()
    except Exception:  # pragma: no cover
        return ""

_KIND = _device_kind()
_IS_V5 = "v5" in _KIND
_IS_V7 = "v7" in _KIND
# v5e has no bf16 VALU -> keep epilogues in f32 there; bf16 on v6e/v7x.
_EPILOGUE_DTYPE = jnp.float32 if _IS_V5 else jnp.bfloat16
# v7x has 64 MiB physical VMEM per TC -> smaller tile cap + tighter limit.
_THW_CAP = 8192 if _IS_V7 else 16384
_VMEM_LIMIT = (48 << 20) if _IS_V7 else (64 << 20)
_LANE = 128


def _net_kernel(ep_dtype, x_ref, w1_ref, b1_ref, w2_ref, b2_ref, w3_ref,
                b3_ref, w4_ref, b4_ref, o_ref):
    """x_ref: (1, C, thw) f32; w*: (cout, cin) bf16; b1..3: (cout,1) ep_dtype;
    b4: (Q,1) f32; o_ref: (1, Q, thw) f32."""
    zero = jnp.zeros((), ep_dtype)
    x = x_ref[0].astype(jnp.bfloat16)                      # (C, thw) -- tiny cast

    # ---- layer 1 on the MXU (K=C is tiny but the MXU is otherwise idle) ----
    h = jnp.dot(w1_ref[...], x, preferred_element_type=jnp.float32)
    h = jnp.maximum(h.astype(ep_dtype) + b1_ref[...], zero).astype(jnp.bfloat16)

    # ---- layers 2,3: bf16 MXU matmuls, epilogue in ep_dtype ----------------
    h = jnp.dot(w2_ref[...], h, preferred_element_type=jnp.float32)
    h = jnp.maximum(h.astype(ep_dtype) + b2_ref[...], zero).astype(jnp.bfloat16)

    h = jnp.dot(w3_ref[...], h, preferred_element_type=jnp.float32)
    h = jnp.maximum(h.astype(ep_dtype) + b3_ref[...], zero).astype(jnp.bfloat16)

    # ---- layer 4 (no BN / ReLU), f32 bias, lane-dense f32 store ------------
    out = jnp.dot(w4_ref[...], h, preferred_element_type=jnp.float32)
    o_ref[0] = (out + b4_ref[...]).astype(o_ref.dtype)


def _resident_spec(shape):
    # Small parameter, constant block index -> stays resident in VMEM.
    return pl.BlockSpec(shape, lambda n, s: (0,) * len(shape))


def _choose_tiling(HW, N, cap):
    """Pick a lane-dense spatial tile (multiple of 128) minimizing padding."""
    hw128 = -(-HW // _LANE) * _LANE
    if hw128 <= cap:
        thw = hw128                                   # single exact tile
    else:
        best = None
        for t in range(cap, 0, -_LANE):               # prefer larger thw on tie
            pad = -(-hw128 // t) * t
            if best is None or pad < best[1]:
                best = (t, pad)
        thw = best[0]
    # v7x megacore: guarantee >= 2 total grid steps when N == 1.
    if N == 1 and -(-hw128 // thw) == 1 and hw128 >= 2 * _LANE:
        thw = -(-(hw128 // 2) // _LANE) * _LANE
        while 2 * thw < hw128:
            thw += _LANE
    HW_pad = -(-hw128 // thw) * thw
    return thw, HW_pad


@jax.jit
def net_forward(x_nchw, params):
    """Folded Net forward.  x_nchw: (N, C, H, W) float32 -> (N, Q, H, W)."""
    w1, b1, w2, b2, w3, b3, w4, b4 = params
    N, C, H, W = x_nchw.shape
    HID = w1.shape[0]
    Q = w4.shape[0]
    HW = H * W

    thw, HW_pad = _choose_tiling(HW, N, _THW_CAP)

    x = x_nchw.reshape(N, C, HW)                      # free, contiguous reshape
    if HW_pad != HW:
        x = jnp.pad(x, ((0, 0), (0, 0), (0, HW_pad - HW)))

    grid = (N, HW_pad // thw)

    flops = 2 * N * HW_pad * (C * HID + 2 * HID * HID + HID * Q)
    bytes_accessed = (x.size * 4 + N * HW_pad * Q * 4
                      + (w1.size + w2.size + w3.size + w4.size) * 2
                      + (b1.size + b2.size + b3.size) * b1.dtype.itemsize
                      + b4.size * 4)

    out = pl.pallas_call(
        functools.partial(_net_kernel, _EPILOGUE_DTYPE),
        out_shape=jax.ShapeDtypeStruct((N, Q, HW_pad), jnp.float32),
        grid_spec=pltpu.PrefetchScalarGridSpec(
            num_scalar_prefetch=0,
            grid=grid,
            in_specs=[
                pl.BlockSpec((1, C, thw), lambda n, s: (n, 0, s)),
                _resident_spec(w1.shape), _resident_spec(b1.shape),
                _resident_spec(w2.shape), _resident_spec(b2.shape),
                _resident_spec(w3.shape), _resident_spec(b3.shape),
                _resident_spec(w4.shape), _resident_spec(b4.shape),
            ],
            out_specs=pl.BlockSpec((1, Q, thw), lambda n, s: (n, 0, s)),
        ),
        compiler_params=pltpu.CompilerParams(
            dimension_semantics=("parallel", "parallel"),
            vmem_limit_bytes=_VMEM_LIMIT),
        cost_estimate=pl.CostEstimate(
            flops=flops, transcendentals=0, bytes_accessed=bytes_accessed),
    )(x, w1, b1, w2, b2, w3, b3, w4, b4)

    if HW_pad != HW:
        out = out[:, :, :HW]
    return out.reshape(N, Q, H, W)


def make_params(key, num_channels, num_quantiles, hidden=128, eps=1e-5):
    """Deterministic synthetic params; eval-mode BN folded into the convs.
    Weights are bf16 (MXU path); biases 1-3 pre-cast to the epilogue dtype."""
    ks = jax.random.split(key, 4)
    dims = [(num_channels, hidden), (hidden, hidden), (hidden, hidden),
            (hidden, num_quantiles)]
    params = []
    for li, (cin, cout) in enumerate(dims):
        kw, kb, kg, kbe, km, kv = jax.random.split(ks[li], 6)
        bound = 1.0 / float(jnp.sqrt(float(cin)))
        w = jax.random.uniform(kw, (cout, cin), jnp.float32, -bound, bound)
        b = jax.random.uniform(kb, (cout,), jnp.float32, -bound, bound)
        if li < 3:  # layers followed by BatchNorm2d (eval mode, folded)
            gamma = 1.0 + 0.1 * jax.random.normal(kg, (cout,), jnp.float32)
            beta = 0.1 * jax.random.normal(kbe, (cout,), jnp.float32)
            mean = 0.1 * jax.random.normal(km, (cout,), jnp.float32)
            var = jnp.abs(1.0 + 0.1 * jax.random.normal(kv, (cout,), jnp.float32))
            s = gamma / jnp.sqrt(var + eps)
            w_eff = w * s[:, None]
            b_eff = b * s + beta - mean * s
            b_dtype = _EPILOGUE_DTYPE
        else:
            w_eff, b_eff = w, b
            b_dtype = jnp.float32
        params.append(w_eff.astype(jnp.bfloat16))              # (cout, cin)
        params.append(b_eff.reshape(cout, 1).astype(b_dtype))  # (cout, 1)
    return tuple(params)


def _reference(x_nchw, params):
    """Pure-JAX f32 reference on the same (already bf16-rounded) weights."""
    w1, b1, w2, b2, w3, b3, w4, b4 = params
    N, C, H, W = x_nchw.shape

    def lin(w, b, t):
        return (jnp.einsum("oc,ncs->nos", w.astype(jnp.float32), t)
                + b.astype(jnp.float32)[None])

    t = x_nchw.reshape(N, C, H * W).astype(jnp.float32)
    t = jnp.maximum(lin(w1, b1, t), 0.0)
    t = jnp.maximum(lin(w2, b2, t), 0.0)
    t = jnp.maximum(lin(w3, b3, t), 0.0)
    t = lin(w4, b4, t)
    return t.reshape(N, -1, H, W)


if __name__ == "__main__":
    num_channels = 4
    num_quantiles = 8
    N, H, W = 2, 16, 16

    key = jax.random.PRNGKey(0)
    kx, kp = jax.random.split(key)
    x = jax.random.normal(kx, (N, num_channels, H, W), jnp.float32)
    params = make_params(kp, num_channels, num_quantiles)

    out = jax.block_until_ready(net_forward(x, params))
    ref = _reference(x, params)

    assert out.shape == (N, num_quantiles, H, W), out.shape
    # bf16 activations (and bf16 epilogue on v6e/v7x) -> loosened tolerance.
    assert jnp.allclose(out, ref, atol=5e-2, rtol=5e-2), "mismatch vs reference"

    print("KERNEL_OK")
</pallas_src>

<mosaic_0001>
module attributes {stable_mosaic.version = 11 : i64} {
  func.func @_net_kernel(%arg0: i32, %arg1: i32, %arg2: memref<1x4x256xf32, #tpu.memory_space<vmem>>, %arg3: memref<128x4xbf16, #tpu.memory_space<vmem>>, %arg4: memref<128x1xbf16, #tpu.memory_space<vmem>>, %arg5: memref<128x128xbf16, #tpu.memory_space<vmem>>, %arg6: memref<128x1xbf16, #tpu.memory_space<vmem>>, %arg7: memref<128x128xbf16, #tpu.memory_space<vmem>>, %arg8: memref<128x1xbf16, #tpu.memory_space<vmem>>, %arg9: memref<8x128xbf16, #tpu.memory_space<vmem>>, %arg10: memref<8x1xf32, #tpu.memory_space<vmem>>, %arg11: memref<1x8x256xf32, #tpu.memory_space<vmem>>) attributes {dimension_semantics = [#tpu.dimension_semantics<parallel>, #tpu.dimension_semantics<parallel>], iteration_bounds = array<i64: 2, 1>, scalar_prefetch = 0 : i64, scratch_operands = 0 : i64, tpu.core_type = #tpu.core_type<tc>, window_params = [{transform_indices = @transform_0, window_bounds = array<i64: 1, 4, 256>}, {pipeline_mode = #tpu.pipeline_mode<synchronous>, transform_indices = @transform_1, window_bounds = array<i64: 128, 4>}, {pipeline_mode = #tpu.pipeline_mode<synchronous>, transform_indices = @transform_2, window_bounds = array<i64: 128, 1>}, {pipeline_mode = #tpu.pipeline_mode<synchronous>, transform_indices = @transform_3, window_bounds = array<i64: 128, 128>}, {pipeline_mode = #tpu.pipeline_mode<synchronous>, transform_indices = @transform_4, window_bounds = array<i64: 128, 1>}, {pipeline_mode = #tpu.pipeline_mode<synchronous>, transform_indices = @transform_5, window_bounds = array<i64: 128, 128>}, {pipeline_mode = #tpu.pipeline_mode<synchronous>, transform_indices = @transform_6, window_bounds = array<i64: 128, 1>}, {pipeline_mode = #tpu.pipeline_mode<synchronous>, transform_indices = @transform_7, window_bounds = array<i64: 8, 128>}, {pipeline_mode = #tpu.pipeline_mode<synchronous>, transform_indices = @transform_8, window_bounds = array<i64: 8, 1>}, {transform_indices = @transform_9, window_bounds = array<i64: 1, 8, 256>}]} {
    %c0 = arith.constant 0 : index
    %c0_0 = arith.constant 0 : index
    %c0_1 = arith.constant 0 : index
    %0 = vector.load %arg2[%c0, %c0_0, %c0_1] : memref<1x4x256xf32, #tpu.memory_space<vmem>>, vector<1x4x256xf32>
    %1 = vector.shape_cast %0 : vector<1x4x256xf32> to vector<4x256xf32>
    %2 = arith.truncf %1 : vector<4x256xf32> to vector<4x256xbf16>
    %c0_2 = arith.constant 0 : index
    %c0_3 = arith.constant 0 : index
    %3 = vector.load %arg3[%c0_2, %c0_3] : memref<128x4xbf16, #tpu.memory_space<vmem>>, vector<128x4xbf16>
    %cst = arith.constant dense<0.000000e+00> : vector<128x256xf32>
    %4 = tpu.matmul %3, %2, %cst {dimension_numbers = #tpu.dot_dimension_numbers<[1], [0], [0], [1], [0, 0, 1, 1], [], []>} : vector<128x4xbf16>, vector<4x256xbf16>, vector<128x256xf32> -> vector<128x256xf32>
    %5 = arith.truncf %4 : vector<128x256xf32> to vector<128x256xbf16>
    %c0_4 = arith.constant 0 : index
    %c0_5 = arith.constant 0 : index
    %6 = vector.load %arg4[%c0_4, %c0_5] : memref<128x1xbf16, #tpu.memory_space<vmem>>, vector<128x1xbf16>
    %7 = vector.broadcast %6 : vector<128x1xbf16> to vector<128x256xbf16>
    %8 = arith.addf %5, %7 : vector<128x256xbf16>
    %cst_6 = arith.constant 0.000000e+00 : bf16
    %9 = vector.broadcast %cst_6 : bf16 to vector<128x256xbf16>
    %10 = arith.maximumf %8, %9 : vector<128x256xbf16>
    %c0_7 = arith.constant 0 : index
    %c0_8 = arith.constant 0 : index
    %11 = vector.load %arg5[%c0_7, %c0_8] : memref<128x128xbf16, #tpu.memory_space<vmem>>, vector<128x128xbf16>
    %cst_9 = arith.constant dense<0.000000e+00> : vector<128x256xf32>
    %12 = tpu.matmul %11, %10, %cst_9 {dimension_numbers = #tpu.dot_dimension_numbers<[1], [0], [0], [1], [0, 0, 1, 1], [], []>} : vector<128x128xbf16>, vector<128x256xbf16>, vector<128x256xf32> -> vector<128x256xf32>
    %13 = arith.truncf %12 : vector<128x256xf32> to vector<128x256xbf16>
    %c0_10 = arith.constant 0 : index
    %c0_11 = arith.constant 0 : index
    %14 = vector.load %arg6[%c0_10, %c0_11] : memref<128x1xbf16, #tpu.memory_space<vmem>>, vector<128x1xbf16>
    %15 = vector.broadcast %14 : vector<128x1xbf16> to vector<128x256xbf16>
    %16 = arith.addf %13, %15 : vector<128x256xbf16>
    %cst_12 = arith.constant 0.000000e+00 : bf16
    %17 = vector.broadcast %cst_12 : bf16 to vector<128x256xbf16>
    %18 = arith.maximumf %16, %17 : vector<128x256xbf16>
    %c0_13 = arith.constant 0 : index
    %c0_14 = arith.constant 0 : index
    %19 = vector.load %arg7[%c0_13, %c0_14] : memref<128x128xbf16, #tpu.memory_space<vmem>>, vector<128x128xbf16>
    %cst_15 = arith.constant dense<0.000000e+00> : vector<128x256xf32>
    %20 = tpu.matmul %19, %18, %cst_15 {dimension_numbers = #tpu.dot_dimension_numbers<[1], [0], [0], [1], [0, 0, 1, 1], [], []>} : vector<128x128xbf16>, vector<128x256xbf16>, vector<128x256xf32> -> vector<128x256xf32>
    %21 = arith.truncf %20 : vector<128x256xf32> to vector<128x256xbf16>
    %c0_16 = arith.constant 0 : index
    %c0_17 = arith.constant 0 : index
    %22 = vector.load %arg8[%c0_16, %c0_17] : memref<128x1xbf16, #tpu.memory_space<vmem>>, vector<128x1xbf16>
    %23 = vector.broadcast %22 : vector<128x1xbf16> to vector<128x256xbf16>
    %24 = arith.addf %21, %23 : vector<128x256xbf16>
    %cst_18 = arith.constant 0.000000e+00 : bf16
    %25 = vector.broadcast %cst_18 : bf16 to vector<128x256xbf16>
    %26 = arith.maximumf %24, %25 : vector<128x256xbf16>
    %c0_19 = arith.constant 0 : index
    %c0_20 = arith.constant 0 : index
    %27 = vector.load %arg9[%c0_19, %c0_20] : memref<8x128xbf16, #tpu.memory_space<vmem>>, vector<8x128xbf16>
    %cst_21 = arith.constant dense<0.000000e+00> : vector<8x256xf32>
    %28 = tpu.matmul %27, %26, %cst_21 {dimension_numbers = #tpu.dot_dimension_numbers<[1], [0], [0], [1], [0, 0, 1, 1], [], []>} : vector<8x128xbf16>, vector<128x256xbf16>, vector<8x256xf32> -> vector<8x256xf32>
    %c0_22 = arith.constant 0 : index
    %c0_23 = arith.constant 0 : index
    %29 = vector.load %arg10[%c0_22, %c0_23] : memref<8x1xf32, #tpu.memory_space<vmem>>, vector<8x1xf32>
    %30 = vector.broadcast %29 : vector<8x1xf32> to vector<8x256xf32>
    %31 = arith.addf %28, %30 : vector<8x256xf32>
    %c0_24 = arith.constant 0 : index
    %c0_25 = arith.constant 0 : index
    %c0_26 = arith.constant 0 : index
    %32 = vector.load %arg11[%c0_24, %c0_25, %c0_26] : memref<1x8x256xf32, #tpu.memory_space<vmem>>, vector<1x8x256xf32>
    %33 = vector.shape_cast %32 : vector<1x8x256xf32> to vector<8x256xf32>
    %34 = vector.shape_cast %31 : vector<8x256xf32> to vector<1x8x256xf32>
    tpu.vector_store %arg11[%c0_24, %c0_25, %c0_26], %34 {strides = array<i32>} : memref<1x8x256xf32, #tpu.memory_space<vmem>>, vector<1x8x256xf32>,
    return
  }
  func.func @transform_0(%arg0: i32, %arg1: i32) -> (i32, i32, i32) {
    %c0_i32 = arith.constant 0 : i32
    %c0_i32_0 = arith.constant 0 : i32
    return %arg0, %c0_i32, %arg1 : i32, i32, i32
  }
  func.func @transform_1(%arg0: i32, %arg1: i32) -> (i32, i32) {
    %c0_i32 = arith.constant 0 : i32
    %c0_i32_0 = arith.constant 0 : i32
    %c0_i32_1 = arith.constant 0 : i32
    return %c0_i32, %c0_i32_0 : i32, i32
  }
  func.func @transform_2(%arg0: i32, %arg1: i32) -> (i32, i32) {
    %c0_i32 = arith.constant 0 : i32
    %c0_i32_0 = arith.constant 0 : i32
    %c0_i32_1 = arith.constant 0 : i32
    return %c0_i32, %c0_i32_0 : i32, i32
  }
  func.func @transform_3(%arg0: i32, %arg1: i32) -> (i32, i32) {
    %c0_i32 = arith.constant 0 : i32
    %c0_i32_0 = arith.constant 0 : i32
    %c0_i32_1 = arith.constant 0 : i32
    return %c0_i32, %c0_i32_0 : i32, i32
  }
  func.func @transform_4(%arg0: i32, %arg1: i32) -> (i32, i32) {
    %c0_i32 = arith.constant 0 : i32
    %c0_i32_0 = arith.constant 0 : i32
    %c0_i32_1 = arith.constant 0 : i32
    return %c0_i32, %c0_i32_0 : i32, i32
  }
  func.func @transform_5(%arg0: i32, %arg1: i32) -> (i32, i32) {
    %c0_i32 = arith.constant 0 : i32
    %c0_i32_0 = arith.constant 0 : i32
    %c0_i32_1 = arith.constant 0 : i32
    return %c0_i32, %c0_i32_0 : i32, i32
  }
  func.func @transform_6(%arg0: i32, %arg1: i32) -> (i32, i32) {
    %c0_i32 = arith.constant 0 : i32
    %c0_i32_0 = arith.constant 0 : i32
    %c0_i32_1 = arith.constant 0 : i32
    return %c0_i32, %c0_i32_0 : i32, i32
  }
  func.func @transform_7(%arg0: i32, %arg1: i32) -> (i32, i32) {
    %c0_i32 = arith.constant 0 : i32
    %c0_i32_0 = arith.constant 0 : i32
    %c0_i32_1 = arith.constant 0 : i32
    return %c0_i32, %c0_i32_0 : i32, i32
  }
  func.func @transform_8(%arg0: i32, %arg1: i32) -> (i32, i32) {
    %c0_i32 = arith.constant 0 : i32
    %c0_i32_0 = arith.constant 0 : i32
    %c0_i32_1 = arith.constant 0 : i32
    return %c0_i32, %c0_i32_0 : i32, i32
  }
  func.func @transform_9(%arg0: i32, %arg1: i32) -> (i32, i32, i32) {
    %c0_i32 = arith.constant 0 : i32
    %c0_i32_0 = arith.constant 0 : i32
    return %arg0, %c0_i32, %arg1 : i32, i32, i32
  }
}

</mosaic_0001>

<llo_original>
// kernel: net_forward.1
$region0: #{net_forward.1}
  #allocation0 [shape = 'u32[]', space=smem, size = 0x4, offset = 0x4, fixed_abs, tag = 'smem constant byte address 0x4 - core index']
  #allocation1 [shape = 'u32[144,128]{1,0:T(1,128)}', space=vmem, size = 0x12000, scoped, tag = 'internal scratch']
  %s0 = inlined_call_operand.vmem [shape: f32[2,4,256], index: 0, kind: input, shape index: {}]
  %s1 = inlined_call_operand.vmem [shape: bf16[128,4], index: 1, kind: input, shape index: {}]
  %s2 = inlined_call_operand.vmem [shape: bf16[128,1], index: 2, kind: input, shape index: {}]
  %s3 = inlined_call_operand.vmem [shape: bf16[128,128], index: 3, kind: input, shape index: {}]
  %s4 = inlined_call_operand.vmem [shape: bf16[128,1], index: 4, kind: input, shape index: {}]
  %s5 = inlined_call_operand.vmem [shape: bf16[128,128], index: 5, kind: input, shape index: {}]
  %s6 = inlined_call_operand.vmem [shape: bf16[128,1], index: 6, kind: input, shape index: {}]
  %s7 = inlined_call_operand.vmem [shape: bf16[8,128], index: 7, kind: input, shape index: {}]
  %s8 = inlined_call_operand.vmem [shape: f32[8,1], index: 8, kind: input, shape index: {}]
  %s9 = inlined_call_operand.vmem [shape: f32[2,8,256], index: 9, kind: output, shape index: {}]
  %s10 = sld [smem:[#allocation0]]
  $region69: #{net_forward.1} parent=0
    _
  %s12 = ssub.s32 1, %s10
  %s13 = scalar_select 0, %s12, %s10
  loop: start=0, step=1, limit=4
  $region2: #{net_forward.1} parent=0 // loop_pre_header
    _
  $region3: #{net_forward.1} parent=0 // loop_header
    %s15 = sphi 0, %s19
    %p16 = scmp.ge.s32.totalorder %s15, 4
    %s22 = sphi 0, %s34
    %s23 = sphi 0, %s30
    %s24 = sphi 0, %s22
    %s25 = sphi 0, %s23
    %s26 = sphi 0, %s24
    %s27 = sphi 0, %s25
    %s39 = sphi 0, %s41
    %s42 = sphi 0, %s39
    %s43 = sphi 0, %s42
    %s59 = sphi 0, %s43
    %s63 = sphi 0, %s63
    %s65 = sphi 0, %s63
    %s66 = sphi 0, %s65
    %s80 = sphi 0, %s66
    %s84 = sphi 0, %s84
    %s86 = sphi 0, %s84
    %s87 = sphi 0, %s86
    %s101 = sphi 0, %s87
    %s105 = sphi 0, %s105
    %s107 = sphi 0, %s105
    %s108 = sphi 0, %s107
    %s122 = sphi 0, %s108
    %s126 = sphi 0, %s126
    %s128 = sphi 0, %s126
    %s129 = sphi 0, %s128
    %s143 = sphi 0, %s129
    %s147 = sphi 0, %s147
    %s149 = sphi 0, %s147
    %s150 = sphi 0, %s149
    %s164 = sphi 0, %s150
    %s168 = sphi 0, %s168
    %s170 = sphi 0, %s168
    %s171 = sphi 0, %s170
    %s185 = sphi 0, %s171
    %s189 = sphi 0, %s189
    %s191 = sphi 0, %s189
    %s192 = sphi 0, %s191
    %s206 = sphi 0, %s192
    %s210 = sphi 0, %s210
    %s212 = sphi 0, %s210
    %s213 = sphi 0, %s212
    %s227 = sphi 0, %s213
    %s235 = sphi 0, %s237
    %s238 = sphi 0, %s235
    %s239 = sphi 0, %s238
    %s255 = sphi 0, %s239
  $region4: #{net_forward.1} parent=0 // loop_header_branch
    %18 = sbr.rel (%p16) target = $region8
  $region5: #{net_forward.1} parent=0 // loop_body
    %s20 = ssub.s32 %s15, 1
    %s21 = ssub.s32 %s15, 2
    %s28 = sadd.s32 1, %s23
    %p29 = scmp.ge.s32.totalorder %s28, 1
    %s30 = scalar_select %p29, 0, %s28
    %s31 = sadd.s32 1, %s22
    %s32 = scalar_select %p29, %s31, %s22
    %p33 = scmp.ge.s32.totalorder %s32, 2
    %s34 = scalar_select %p33, 0, %s32
    %s35 = ssub.s32 %s22, %s34
    %s36 = ssub.s32 %s23, %s30
    %s37 = sor.u32 %s35, %s36
    %p38 = scmp.eq.s32.totalorder %s37, 0
    %s40 = sadd.s32 %s39, 1
    %s41 = scalar_select %p38, %s39, %s40
    %p44 = pneg %p38
    %p45 = scmp.eq.s32.totalorder %s15, 1
    %p46 = por %p44, %p45
    %p47 = scmp.ne.s32.totalorder %s39, %s42
    %p48 = scmp.eq.s32.totalorder %s15, 0
    %p49 = por %p47, %p48
    %p50 = scmp.ne.s32.totalorder %s39, %s42
    %p51 = scmp.eq.s32.totalorder %s20, 1
    %p52 = por %p50, %p51
    %p53 = scmp.ne.s32.totalorder %s42, %s43
    %p54 = scmp.eq.s32.totalorder %s20, 0
    %p55 = por %p53, %p54
    %p56 = scmp.ne.s32.totalorder %s42, %s43
    %p57 = scmp.eq.s32.totalorder %s21, 1
    %p58 = por %p56, %p57
    %p60 = scmp.ne.s32.totalorder %s43, %s59
    %p61 = scmp.eq.s32.totalorder %s21, 0
    %p62 = por %p60, %p61
    %s64 = sadd.s32 %s63, 1
    %p67 = scmp.eq.s32.totalorder %s15, 1
    %p68 = scmp.ne.s32.totalorder %s63, %s65
    %p69 = scmp.eq.s32.totalorder %s15, 0
    %p70 = por %p68, %p69
    %p71 = scmp.ne.s32.totalorder %s63, %s65
    %p72 = scmp.eq.s32.totalorder %s20, 1
    %p73 = por %p71, %p72
    %p74 = scmp.ne.s32.totalorder %s65, %s66
    %p75 = scmp.eq.s32.totalorder %s20, 0
    %p76 = por %p74, %p75
    %p77 = scmp.ne.s32.totalorder %s65, %s66
    %p78 = scmp.eq.s32.totalorder %s21, 1
    %p79 = por %p77, %p78
    %p81 = scmp.ne.s32.totalorder %s66, %s80
    %p82 = scmp.eq.s32.totalorder %s21, 0
    %p83 = por %p81, %p82
    %s85 = sadd.s32 %s84, 1
    %p88 = scmp.eq.s32.totalorder %s15, 1
    %p89 = scmp.ne.s32.totalorder %s84, %s86
    %p90 = scmp.eq.s32.totalorder %s15, 0
    %p91 = por %p89, %p90
    %p92 = scmp.ne.s32.totalorder %s84, %s86
    %p93 = scmp.eq.s32.totalorder %s20, 1
    %p94 = por %p92, %p93
    %p95 = scmp.ne.s32.totalorder %s86, %s87
    %p96 = scmp.eq.s32.totalorder %s20, 0
    %p97 = por %p95, %p96
    %p98 = scmp.ne.s32.totalorder %s86, %s87
    %p99 = scmp.eq.s32.totalorder %s21, 1
    %p100 = por %p98, %p99
    %p102 = scmp.ne.s32.totalorder %s87, %s101
    %p103 = scmp.eq.s32.totalorder %s21, 0
    %p104 = por %p102, %p103
    %s106 = sadd.s32 %s105, 1
    %p109 = scmp.eq.s32.totalorder %s15, 1
    %p110 = scmp.ne.s32.totalorder %s105, %s107
    %p111 = scmp.eq.s32.totalorder %s15, 0
    %p112 = por %p110, %p111
    %p113 = scmp.ne.s32.totalorder %s105, %s107
    %p114 = scmp.eq.s32.totalorder %s20, 1
    %p115 = por %p113, %p114
    %p116 = scmp.ne.s32.totalorder %s107, %s108
    %p117 = scmp.eq.s32.totalorder %s20, 0
    %p118 = por %p116, %p117
    %p119 = scmp.ne.s32.totalorder %s107, %s108
    %p120 = scmp.eq.s32.totalorder %s21, 1
    %p121 = por %p119, %p120
    %p123 = scmp.ne.s32.totalorder %s108, %s122
    %p124 = scmp.eq.s32.totalorder %s21, 0
    %p125 = por %p123, %p124
    %s127 = sadd.s32 %s126, 1
    %p130 = scmp.eq.s32.totalorder %s15, 1
    %p131 = scmp.ne.s32.totalorder %s126, %s128
    %p132 = scmp.eq.s32.totalorder %s15, 0
    %p133 = por %p131, %p132
    %p134 = scmp.ne.s32.totalorder %s126, %s128
    %p135 = scmp.eq.s32.totalorder %s20, 1
    %p136 = por %p134, %p135
    %p137 = scmp.ne.s32.totalorder %s128, %s129
    %p138 = scmp.eq.s32.totalorder %s20, 0
    %p139 = por %p137, %p138
    %p140 = scmp.ne.s32.totalorder %s128, %s129
    %p141 = scmp.eq.s32.totalorder %s21, 1
    %p142 = por %p140, %p141
    %p144 = scmp.ne.s32.totalorder %s129, %s143
    %p145 = scmp.eq.s32.totalorder %s21, 0
    %p146 = por %p144, %p145
    %s148 = sadd.s32 %s147, 1
    %p151 = scmp.eq.s32.totalorder %s15, 1
    %p152 = scmp.ne.s32.totalorder %s147, %s149
    %p153 = scmp.eq.s32.totalorder %s15, 0
    %p154 = por %p152, %p153
    %p155 = scmp.ne.s32.totalorder %s147, %s149
    %p156 = scmp.eq.s32.totalorder %s20, 1
    %p157 = por %p155, %p156
    %p158 = scmp.ne.s32.totalorder %s149, %s150
    %p159 = scmp.eq.s32.totalorder %s20, 0
    %p160 = por %p158, %p159
    %p161 = scmp.ne.s32.totalorder %s149, %s150
    %p162 = scmp.eq.s32.totalorder %s21, 1
    %p163 = por %p161, %p162
    %p165 = scmp.ne.s32.totalorder %s150, %s164
    %p166 = scmp.eq.s32.totalorder %s21, 0
    %p167 = por %p165, %p166
    %s169 = sadd.s32 %s168, 1
    %p172 = scmp.eq.s32.totalorder %s15, 1
    %p173 = scmp.ne.s32.totalorder %s168, %s170
    %p174 = scmp.eq.s32.totalorder %s15, 0
    %p175 = por %p173, %p174
    %p176 = scmp.ne.s32.totalorder %s168, %s170
    %p177 = scmp.eq.s32.totalorder %s20, 1
    %p178 = por %p176, %p177
    %p179 = scmp.ne.s32.totalorder %s170, %s171
    %p180 = scmp.eq.s32.totalorder %s20, 0
    %p181 = por %p179, %p180
    %p182 = scmp.ne.s32.totalorder %s170, %s171
    %p183 = scmp.eq.s32.totalorder %s21, 1
    %p184 = por %p182, %p183
    %p186 = scmp.ne.s32.totalorder %s171, %s185
    %p187 = scmp.eq.s32.totalorder %s21, 0
    %p188 = por %p186, %p187
    %s190 = sadd.s32 %s189, 1
    %p193 = scmp.eq.s32.totalorder %s15, 1
    %p194 = scmp.ne.s32.totalorder %s189, %s191
    %p195 = scmp.eq.s32.totalorder %s15, 0
    %p196 = por %p194, %p195
    %p197 = scmp.ne.s32.totalorder %s189, %s191
    %p198 = scmp.eq.s32.totalorder %s20, 1
    %p199 = por %p197, %p198
    %p200 = scmp.ne.s32.totalorder %s191, %s192
    %p201 = scmp.eq.s32.totalorder %s20, 0
    %p202 = por %p200, %p201
    %p203 = scmp.ne.s32.totalorder %s191, %s192
    %p204 = scmp.eq.s32.totalorder %s21, 1
    %p205 = por %p203, %p204
    %p207 = scmp.ne.s32.totalorder %s192, %s206
    %p208 = scmp.eq.s32.totalorder %s21, 0
    %p209 = por %p207, %p208
    %s211 = sadd.s32 %s210, 1
    %p214 = scmp.eq.s32.totalorder %s15, 1
    %p215 = scmp.ne.s32.totalorder %s210, %s212
    %p216 = scmp.eq.s32.totalorder %s15, 0
    %p217 = por %p215, %p216
    %p218 = scmp.ne.s32.totalorder %s210, %s212
    %p219 = scmp.eq.s32.totalorder %s20, 1
    %p220 = por %p218, %p219
    %p221 = scmp.ne.s32.totalorder %s212, %s213
    %p222 = scmp.eq.s32.totalorder %s20, 0
    %p223 = por %p221, %p222
    %p224 = scmp.ne.s32.totalorder %s212, %s213
    %p225 = scmp.eq.s32.totalorder %s21, 1
    %p226 = por %p224, %p225
    %p228 = scmp.ne.s32.totalorder %s213, %s227
    %p229 = scmp.eq.s32.totalorder %s21, 0
    %p230 = por %p228, %p229
    %s231 = ssub.s32 %s22, %s34
    %s232 = ssub.s32 %s23, %s30
    %s233 = sor.u32 %s231, %s232
    %p234 = scmp.eq.s32.totalorder %s233, 0
    %s236 = sadd.s32 %s235, 1
    %s237 = scalar_select %p234, %s235, %s236
    %p240 = pneg %p234
    %p241 = scmp.eq.s32.totalorder %s15, 1
    %p242 = por %p240, %p241
    %p243 = scmp.ne.s32.totalorder %s235, %s238
    %p244 = scmp.eq.s32.totalorder %s15, 0
    %p245 = por %p243, %p244
    %p246 = scmp.ne.s32.totalorder %s235, %s238
    %p247 = scmp.eq.s32.totalorder %s20, 1
    %p248 = por %p246, %p247
    %p249 = scmp.ne.s32.totalorder %s238, %s239
    %p250 = scmp.eq.s32.totalorder %s20, 0
    %p251 = por %p249, %p250
    %p252 = scmp.ne.s32.totalorder %s238, %s239
    %p253 = scmp.eq.s32.totalorder %s21, 1
    %p254 = por %p252, %p253
    %p256 = scmp.ne.s32.totalorder %s239, %s255
    %p257 = scmp.eq.s32.totalorder %s21, 0
    %p258 = por %p256, %p257
    %p259 = scmp.le.s32.totalorder 1, %s15
    %p260 = scmp.lt.s32.totalorder %s15, 3
    %p261 = pnand %p259, %p260
    %p262 = pneg %p261
    // Predicated region
    $region9: #{net_forward.1} parent=5 // pred_check
      _
    $region10: #{net_forward.1} parent=5 // pred_check_branch
      %264 = sbr.rel (%p261) target = $region12
    $region11: #{net_forward.1} parent=5 // pred_region
      %s265 = ssub.s32 %s15, 1
      // Predicated region
      $region13: #{net_forward.1} parent=11 // pred_check
        %p266 = pneg %p76
      $region14: #{net_forward.1} parent=11 // pred_check_branch
        %268 = sbr.rel (%p266) target = $region16
      $region15: #{net_forward.1} parent=11 // pred_region
        _
      $region16: #{net_forward.1} parent=11 // pred_fallthru
        _
      // Predicated region
      $region17: #{net_forward.1} parent=11 // pred_check
        %p269 = pneg %p97
      $region18: #{net_forward.1} parent=11 // pred_check_branch
        %271 = sbr.rel (%p269) target = $region20
      $region19: #{net_forward.1} parent=11 // pred_region
        _
      $region20: #{net_forward.1} parent=11 // pred_fallthru
        _
      // Predicated region
      $region21: #{net_forward.1} parent=11 // pred_check
        %p272 = pneg %p118
      $region22: #{net_forward.1} parent=11 // pred_check_branch
        %274 = sbr.rel (%p272) target = $region24
      $region23: #{net_forward.1} parent=11 // pred_region
        _
      $region24: #{net_forward.1} parent=11 // pred_fallthru
        _
      // Predicated region
      $region25: #{net_forward.1} parent=11 // pred_check
        %p275 = pneg %p139
      $region26: #{net_forward.1} parent=11 // pred_check_branch
        %277 = sbr.rel (%p275) target = $region28
      $region27: #{net_forward.1} parent=11 // pred_region
        _
      $region28: #{net_forward.1} parent=11 // pred_fallthru
        _
      // Predicated region
      $region29: #{net_forward.1} parent=11 // pred_check
        %p278 = pneg %p160
      $region30: #{net_forward.1} parent=11 // pred_check_branch
        %280 = sbr.rel (%p278) target = $region32
      $region31: #{net_forward.1} parent=11 // pred_region
        _
      $region32: #{net_forward.1} parent=11 // pred_fallthru
        _
      // Predicated region
      $region33: #{net_forward.1} parent=11 // pred_check
        %p281 = pneg %p181
      $region34: #{net_forward.1} parent=11 // pred_check_branch
        %283 = sbr.rel (%p281) target = $region36
      $region35: #{net_forward.1} parent=11 // pred_region
        _
      $region36: #{net_forward.1} parent=11 // pred_fallthru
        _
      // Predicated region
      $region37: #{net_forward.1} parent=11 // pred_check
        %p284 = pneg %p202
      $region38: #{net_forward.1} parent=11 // pred_check_branch
        %286 = sbr.rel (%p284) target = $region40
      $region39: #{net_forward.1} parent=11 // pred_region
        _
      $region40: #{net_forward.1} parent=11 // pred_fallthru
        _
      // Predicated region
      $region41: #{net_forward.1} parent=11 // pred_check
        %p287 = pneg %p223
      $region42: #{net_forward.1} parent=11 // pred_check_branch
        %289 = sbr.rel (%p287) target = $region44
      $region43: #{net_forward.1} parent=11 // pred_region
        _
      $region44: #{net_forward.1} parent=11 // pred_fallthru
        _
    $region12: #{net_forward.1} parent=5 // pred_fallthru
      _
    %p290 = scmp.lt.s32.totalorder %s15, 2
    // Predicated region
    $region45: #{net_forward.1} parent=5 // pred_check
      %p291 = pneg %p290
    $region46: #{net_forward.1} parent=5 // pred_check_branch
      %293 = sbr.rel (%p291) target = $region48
    $region47: #{net_forward.1} parent=5 // pred_region
      // Predicated region
      $region49: #{net_forward.1} parent=47 // pred_check
        %p294 = pneg %p49
      $region50: #{net_forward.1} parent=47 // pred_check_branch
        %296 = sbr.rel (%p294) target = $region52
      $region51: #{net_forward.1} parent=47 // pred_region
        %s297 = smul.u32 2, %s23
        %p298 = scmp.lt.s32.totalorder %s22, 1
        %s299 = scalar_select %p298, %s22, 1
        %p300 = scmp.lt.s32.totalorder %s297, 1
        %s301 = scalar_select %p300, %s297, 1
        %s302 = smul.addr %s299, 2
        %s303 = sadd.s32 %s301, %s302
        %s304 = smul.addr %s303, 4
        %s305 = scalar_lea.vmem %s0, %s304
        %s306 = smul.u32 2, %s23
      $region52: #{net_forward.1} parent=47 // pred_fallthru
        _
    $region48: #{net_forward.1} parent=5 // pred_fallthru
      _
    %p307 = scmp.le.s32.totalorder 1, %s15
    %p308 = scmp.lt.s32.totalorder %s15, 3
    %p309 = pnand %p307, %p308
    %p310 = pneg %p309
    // Predicated region
    $region53: #{net_forward.1} parent=5 // pred_check
      _
    $region54: #{net_forward.1} parent=5 // pred_check_branch
      %312 = sbr.rel (%p309) target = $region56
    $region55: #{net_forward.1} parent=5 // pred_region
      %s313 = ssub.s32 %s15, 1
      %s314 = smul.u32 2, %s25
      %p315 = scmp.lt.s32.totalorder %s24, 1
      %s316 = scalar_select %p315, %s24, 1
      %p317 = scmp.lt.s32.totalorder %s314, 1
      %s318 = scalar_select %p317, %s314, 1
      %s319 = smul.addr %s316, 2
      %s320 = sadd.s32 %s318, %s319
      %s321 = smul.addr %s320, 4
      %s322 = scalar_lea.vmem %s0, %s321
      %p323 = pneg %p55
      %p324 = pneg %p52
      %p325 = pneg %p76
      %p326 = pneg %p73
      %p327 = pneg %p97
      %p328 = pneg %p94
      %p329 = pneg %p118
      %p330 = pneg %p115
      %p331 = pneg %p139
      %p332 = pneg %p136
      %p333 = pneg %p160
      %p334 = pneg %p157
      %p335 = pneg %p181
      %p336 = pneg %p178
      %p337 = pneg %p202
      %p338 = pneg %p199
      %p339 = pneg %p223
      %p340 = pneg %p220
      %p341 = pneg %p251
      %p342 = pneg %p248
      %s343 = smul.u32 2, %s25
      %p344 = scmp.lt.s32.totalorder %s24, 1
      %s345 = scalar_select %p344, %s24, 1
      %p346 = scmp.lt.s32.totalorder %s343, 1
      %s347 = scalar_select %p346, %s343, 1
      %s348 = smul.addr %s345, 2
      %s349 = sadd.s32 %s347, %s348
      %s350 = smul.addr %s349, 8
      %s351 = scalar_lea.vmem %s9, %s350
      %s352 = smul.u32 2, %s25
      %p353 = scmp.lt.s32.totalorder %s24, 1
      %s354 = scalar_select %p353, %s24, 1
      %p355 = scmp.lt.s32.totalorder %s352, 1
      %s356 = scalar_select %p355, %s352, 1
      %s357 = smul.addr %s354, 2
      %s358 = sadd.s32 %s356, %s357
      %s359 = smul.addr %s358, 4
      %s360 = scalar_lea.vmem %s0, %s359
      %s361 = smul.u32 2, %s25
      %s362 = smul.u32 2, %s25
      %p363 = scmp.lt.s32.totalorder %s24, 1
      %s364 = scalar_select %p363, %s24, 1
      %p365 = scmp.lt.s32.totalorder %s362, 1
      %s366 = scalar_select %p365, %s362, 1
      %s367 = smul.addr %s364, 2
      %s368 = sadd.s32 %s366, %s367
      %s369 = smul.addr %s368, 8
      %s370 = scalar_lea.vmem %s9, %s369
      %s371 = smul.u32 2, %s25
      %v373 = vld [vmem:[%s360] sm:$0xff]
      %v375 = vcombine.high %v373, %v373
      %v377 = vpack.c.bf16 %v373, %v373
      %v378 = vpack.c.bf16 %v375, %v375
      %v379 = vld [vmem:[%s1] sm:$0xf]
      %v380 = vld [vmem:[%s1 + $0x4] sm:$0xf]
      %v381 = vld [vmem:[%s1 + $0x8] sm:$0xf]
      %v382 = vld [vmem:[%s1 + $0xc] sm:$0xf]
      %v383 = vld [vmem:[%s1 + $0x10] sm:$0xf]
      %v384 = vld [vmem:[%s1 + $0x14] sm:$0xf]
      %v385 = vld [vmem:[%s1 + $0x18] sm:$0xf]
      %v386 = vld [vmem:[%s1 + $0x1c] sm:$0xf]
      %v387 = vld [vmem:[%s1 + $0x20] sm:$0xf]
      %v388 = vld [vmem:[%s1 + $0x24] sm:$0xf]
      %v389 = vld [vmem:[%s1 + $0x28] sm:$0xf]
      %v390 = vld [vmem:[%s1 + $0x2c] sm:$0xf]
      %v391 = vld [vmem:[%s1 + $0x30] sm:$0xf]
      %v392 = vld [vmem:[%s1 + $0x34] sm:$0xf]
      %v393 = vld [vmem:[%s1 + $0x38] sm:$0xf]
      %v394 = vld [vmem:[%s1 + $0x3c] sm:$0xf]
      %v411 = vunpack.c.l.b16 %v379
      %v412 = vunpack.c.l.b16 %v380
      %v413 = vunpack.c.l.b16 %v381
      %v414 = vunpack.c.l.b16 %v382
      %v415 = vunpack.c.l.b16 %v383
      %v416 = vunpack.c.l.b16 %v384
      %v417 = vunpack.c.l.b16 %v385
      %v418 = vunpack.c.l.b16 %v386
      %v419 = vunpack.c.l.b16 %v387
      %v420 = vunpack.c.l.b16 %v388
      %v421 = vunpack.c.l.b16 %v389
      %v422 = vunpack.c.l.b16 %v390
      %v423 = vunpack.c.l.b16 %v391
      %v424 = vunpack.c.l.b16 %v392
      %v425 = vunpack.c.l.b16 %v393
      %v426 = vunpack.c.l.b16 %v394
      %v427 = vpack.c.b16 %v412, %v411
      %v428 = vpack.c.b16 %v414, %v413
      %v429 = vpack.c.b16 %v416, %v415
      %v430 = vpack.c.b16 %v418, %v417
      %v431 = vpack.c.b16 %v420, %v419
      %v432 = vpack.c.b16 %v422, %v421
      %v433 = vpack.c.b16 %v424, %v423
      %v434 = vpack.c.b16 %v426, %v425
      %vm435 = vcmask 31744
      %v437 = vsel %vm435, %v427, 0
      %v440 = vsel %vm435, %v428, 0
      %v443 = vsel %vm435, %v429, 0
      %v446 = vsel %vm435, %v430, 0
      %v449 = vsel %vm435, %v431, 0
      %v452 = vsel %vm435, %v432, 0
      %v455 = vsel %vm435, %v433, 0
      %v458 = vsel %vm435, %v434, 0
      %vm460 = vcmask 1041408
      %v462 = vsel %vm460, %v377, 0
      %v465 = vsel %vm460, %v378, 0
      %467 = vmatprep.subr.bf16.mxu0 0
      %468 = vmatpush1.bf16.msra.mxu0 0
      %469 = vmatprep.subr.bf16.mxu0 0
      %470 = vmatpush1.bf16.msra.mxu0 0
      %471 = vmatprep.subr.bf16.mxu0 0
      %472 = vmatpush1.bf16.msra.mxu0 0
      %473 = vmatprep.subr.bf16.mxu0 0
      %474 = vmatpush1.bf16.msra.mxu0 0
      %475 = vmatprep.subr.bf16.mxu0 0
      %476 = vmatpush1.bf16.msra.mxu0 0
      %477 = vmatprep.subr.bf16.mxu0 0
      %478 = vmatpush1.bf16.msra.mxu0 0
      %479 = vmatprep.subr.bf16.mxu0 0
      %480 = vmatpush1.bf16.msra.mxu0 0
      %481 = vmatprep.subr.bf16.mxu0 %v465
      %482 = vmatpush1.bf16.msra.mxu0 %v462
      %483 = vmatprep.subr.bf16.mxu0 0
      %484 = vmatpush2.bf16.msra.mxu0 0
      %485 = vmatprep.subr.bf16.mxu0 0
      %486 = vmatpush2.bf16.msra.mxu0 0
      %487 = vmatprep.subr.bf16.mxu0 0
      %488 = vmatpush2.bf16.msra.mxu0 0
      %489 = vmatprep.subr.bf16.mxu0 0
      %490 = vmatpush2.bf16.msra.mxu0 0
      %491 = vmatprep.subr.bf16.mxu0 0
      %492 = vmatpush2.bf16.msra.mxu0 0
      %493 = vmatprep.subr.bf16.mxu0 0
      %494 = vmatpush2.bf16.msra.mxu0 0
      %495 = vmatprep.subr.bf16.mxu0 0
      %496 = vmatpush2.bf16.msra.mxu0 0
      %497 = vmatprep.subr.bf16.mxu0 0
      %498 = vmatpush2.bf16.msra.mxu0 0
      %499 = vmatprep.mubr.bf16.mxu0 0
      %500 = vmatmul.mubr.bf16.gmra.mxu0 %v437
      %v501 = vpop.f32.mrf.mxu0
      %v502 = vadd.f32 0.0, %v501
      %v503 = vpop.f32.mrf.mxu0
      %v504 = vadd.f32 0.0, %v503
      %v505 = vpop.f32.mrf.mxu0
      %v506 = vadd.f32 0.0, %v505
      %v507 = vpop.f32.mrf.mxu0
      %v508 = vadd.f32 0.0, %v507
      %509 = vmatprep.mubr.bf16.mxu0 0
      %510 = vmatmul.mubr.bf16.gmra.mxu0 %v440
      %v511 = vpop.f32.mrf.mxu0
      %v512 = vadd.f32 0.0, %v511
      %v513 = vpop.f32.mrf.mxu0
      %v514 = vadd.f32 0.0, %v513
      %v515 = vpop.f32.mrf.mxu0
      %v516 = vadd.f32 0.0, %v515
      %v517 = vpop.f32.mrf.mxu0
      %v518 = vadd.f32 0.0, %v517
      %519 = vmatprep.mubr.bf16.mxu0 0
      %520 = vmatmul.mubr.bf16.gmra.mxu0 %v443
      %v521 = vpop.f32.mrf.mxu0
      %v522 = vadd.f32 0.0, %v521
      %v523 = vpop.f32.mrf.mxu0
      %v524 = vadd.f32 0.0, %v523
      %v525 = vpop.f32.mrf.mxu0
      %v526 = vadd.f32 0.0, %v525
      %v527 = vpop.f32.mrf.mxu0
      %v528 = vadd.f32 0.0, %v527
      %529 = vmatprep.mubr.bf16.mxu0 0
      %530 = vmatmul.mubr.bf16.gmra.mxu0 %v446
      %v531 = vpop.f32.mrf.mxu0
      %v532 = vadd.f32 0.0, %v531
      %v533 = vpop.f32.mrf.mxu0
      %v534 = vadd.f32 0.0, %v533
      %v535 = vpop.f32.mrf.mxu0
      %v536 = vadd.f32 0.0, %v535
      %v537 = vpop.f32.mrf.mxu0
      %v538 = vadd.f32 0.0, %v537
      %539 = vmatprep.mubr.bf16.mxu0 0
      %540 = vmatmul.mubr.bf16.gmra.mxu0 %v449
      %v541 = vpop.f32.mrf.mxu0
      %v542 = vadd.f32 0.0, %v541
      %v543 = vpop.f32.mrf.mxu0
      %v544 = vadd.f32 0.0, %v543
      %v545 = vpop.f32.mrf.mxu0
      %v546 = vadd.f32 0.0, %v545
      %v547 = vpop.f32.mrf.mxu0
      %v548 = vadd.f32 0.0, %v547
      %549 = vmatprep.mubr.bf16.mxu0 0
      %550 = vmatmul.mubr.bf16.gmra.mxu0 %v452
      %v551 = vpop.f32.mrf.mxu0
      %v552 = vadd.f32 0.0, %v551
      %v553 = vpop.f32.mrf.mxu0
      %v554 = vadd.f32 0.0, %v553
      %v555 = vpop.f32.mrf.mxu0
      %v556 = vadd.f32 0.0, %v555
      %v557 = vpop.f32.mrf.mxu0
      %v558 = vadd.f32 0.0, %v557
      %559 = vmatprep.mubr.bf16.mxu0 0
      %560 = vmatmul.mubr.bf16.gmra.mxu0 %v455
      %v561 = vpop.f32.mrf.mxu0
      %v562 = vadd.f32 0.0, %v561
      %v563 = vpop.f32.mrf.mxu0
      %v564 = vadd.f32 0.0, %v563
      %v565 = vpop.f32.mrf.mxu0
      %v566 = vadd.f32 0.0, %v565
      %v567 = vpop.f32.mrf.mxu0
      %v568 = vadd.f32 0.0, %v567
      %569 = vmatprep.mubr.bf16.mxu0 0
      %570 = vmatmul.mubr.bf16.gmra.mxu0 %v458
      %v571 = vpop.f32.mrf.mxu0
      %v572 = vadd.f32 0.0, %v571
      %v573 = vpop.f32.mrf.mxu0
      %v574 = vadd.f32 0.0, %v573
      %v575 = vpop.f32.mrf.mxu0
      %v576 = vadd.f32 0.0, %v575
      %v577 = vpop.f32.mrf.mxu0
      %v578 = vadd.f32 0.0, %v577
      %579 = vdwg.mxu0
      %v580 = vpack.c.bf16 %v506, %v502
      %v581 = vpack.c.bf16 %v508, %v504
      %v582 = vpack.c.bf16 %v516, %v512
      %v583 = vpack.c.bf16 %v518, %v514
      %v584 = vpack.c.bf16 %v526, %v522
      %v585 = vpack.c.bf16 %v528, %v524
      %v586 = vpack.c.bf16 %v536, %v532
      %v587 = vpack.c.bf16 %v538, %v534
      %v588 = vpack.c.bf16 %v546, %v542
      %v589 = vpack.c.bf16 %v548, %v544
      %v590 = vpack.c.bf16 %v556, %v552
      %v591 = vpack.c.bf16 %v558, %v554
      %v592 = vpack.c.bf16 %v566, %v562
      %v593 = vpack.c.bf16 %v568, %v564
      %v594 = vpack.c.bf16 %v576, %v572
      %v595 = vpack.c.bf16 %v578, %v574
      %v596 = vld [vmem:[%s2] sm:$0xf]
      %v597 = vld [vmem:[%s2 + $0x4] sm:$0xf]
      %v598 = vld [vmem:[%s2 + $0x8] sm:$0xf]
      %v599 = vld [vmem:[%s2 + $0xc] sm:$0xf]
      %v600 = vld [vmem:[%s2 + $0x10] sm:$0xf]
      %v601 = vld [vmem:[%s2 + $0x14] sm:$0xf]
      %v602 = vld [vmem:[%s2 + $0x18] sm:$0xf]
      %v603 = vld [vmem:[%s2 + $0x1c] sm:$0xf]
      %v604 = vld [vmem:[%s2 + $0x20] sm:$0xf]
      %v605 = vld [vmem:[%s2 + $0x24] sm:$0xf]
      %v606 = vld [vmem:[%s2 + $0x28] sm:$0xf]
      %v607 = vld [vmem:[%s2 + $0x2c] sm:$0xf]
      %v608 = vld [vmem:[%s2 + $0x30] sm:$0xf]
      %v609 = vld [vmem:[%s2 + $0x34] sm:$0xf]
      %v610 = vld [vmem:[%s2 + $0x38] sm:$0xf]
      %v611 = vld [vmem:[%s2 + $0x3c] sm:$0xf]
      %613 = vset.pattern.permute.xlu0 0
      %614 = vperm.xlu0 %613, %v596
      %v615 = vpop.permute.xlu0 %614
      %v618 = vunpack.c.l.s4 839922192
      %v619 = vunpack.c.0.s8 %v618
      %v620 = vlaneseq
      %v621 = vshrl.u32 %v620, 7
      %v622 = vsub.s32 %v619, %v621
      %v623 = vrot.slane %v615, %v622
      %625 = vset.pattern.permute.xlu0 0
      %626 = vperm.xlu0 %625, %v597
      %v627 = vpop.permute.xlu0 %626
      %v630 = vunpack.c.l.s4 839922192
      %v631 = vunpack.c.0.s8 %v630
      %v632 = vlaneseq
      %v633 = vshrl.u32 %v632, 7
      %v634 = vsub.s32 %v631, %v633
      %v635 = vrot.slane %v627, %v634
      %637 = vset.pattern.permute.xlu0 0
      %638 = vperm.xlu0 %637, %v598
      %v639 = vpop.permute.xlu0 %638
      %v642 = vunpack.c.l.s4 839922192
      %v643 = vunpack.c.0.s8 %v642
      %v644 = vlaneseq
      %v645 = vshrl.u32 %v644, 7
      %v646 = vsub.s32 %v643, %v645
      %v647 = vrot.slane %v639, %v646
      %649 = vset.pattern.permute.xlu0 0
      %650 = vperm.xlu0 %649, %v599
      %v651 = vpop.permute.xlu0 %650
      %v654 = vunpack.c.l.s4 839922192
      %v655 = vunpack.c.0.s8 %v654
      %v656 = vlaneseq
      %v657 = vshrl.u32 %v656, 7
      %v658 = vsub.s32 %v655, %v657
      %v659 = vrot.slane %v651, %v658
      %661 = vset.pattern.permute.xlu0 0
      %662 = vperm.xlu0 %661, %v600
      %v663 = vpop.permute.xlu0 %662
      %v666 = vunpack.c.l.s4 839922192
      %v667 = vunpack.c.0.s8 %v666
      %v668 = vlaneseq
      %v669 = vshrl.u32 %v668, 7
      %v670 = vsub.s32 %v667, %v669
      %v671 = vrot.slane %v663, %v670
      %673 = vset.pattern.permute.xlu0 0
      %674 = vperm.xlu0 %673, %v601
      %v675 = vpop.permute.xlu0 %674
      %v678 = vunpack.c.l.s4 839922192
      %v679 = vunpack.c.0.s8 %v678
      %v680 = vlaneseq
      %v681 = vshrl.u32 %v680, 7
      %v682 = vsub.s32 %v679, %v681
      %v683 = vrot.slane %v675, %v682
      %685 = vset.pattern.permute.xlu0 0
      %686 = vperm.xlu0 %685, %v602
      %v687 = vpop.permute.xlu0 %686
      %v690 = vunpack.c.l.s4 839922192
      %v691 = vunpack.c.0.s8 %v690
      %v692 = vlaneseq
      %v693 = vshrl.u32 %v692, 7
      %v694 = vsub.s32 %v691, %v693
      %v695 = vrot.slane %v687, %v694
      %697 = vset.pattern.permute.xlu0 0
      %698 = vperm.xlu0 %697, %v603
      %v699 = vpop.permute.xlu0 %698
      %v702 = vunpack.c.l.s4 839922192
      %v703 = vunpack.c.0.s8 %v702
      %v704 = vlaneseq
      %v705 = vshrl.u32 %v704, 7
      %v706 = vsub.s32 %v703, %v705
      %v707 = vrot.slane %v699, %v706
      %709 = vset.pattern.permute.xlu0 0
      %710 = vperm.xlu0 %709, %v604
      %v711 = vpop.permute.xlu0 %710
      %v714 = vunpack.c.l.s4 839922192
      %v715 = vunpack.c.0.s8 %v714
      %v716 = vlaneseq
      %v717 = vshrl.u32 %v716, 7
      %v718 = vsub.s32 %v715, %v717
      %v719 = vrot.slane %v711, %v718
      %721 = vset.pattern.permute.xlu0 0
      %722 = vperm.xlu0 %721, %v605
      %v723 = vpop.permute.xlu0 %722
      %v726 = vunpack.c.l.s4 839922192
      %v727 = vunpack.c.0.s8 %v726
      %v728 = vlaneseq
      %v729 = vshrl.u32 %v728, 7
      %v730 = vsub.s32 %v727, %v729
      %v731 = vrot.slane %v723, %v730
      %733 = vset.pattern.permute.xlu0 0
      %734 = vperm.xlu0 %733, %v606
      %v735 = vpop.permute.xlu0 %734
      %v738 = vunpack.c.l.s4 839922192
      %v739 = vunpack.c.0.s8 %v738
      %v740 = vlaneseq
      %v741 = vshrl.u32 %v740, 7
      %v742 = vsub.s32 %v739, %v741
      %v743 = vrot.slane %v735, %v742
      %745 = vset.pattern.permute.xlu0 0
      %746 = vperm.xlu0 %745, %v607
      %v747 = vpop.permute.xlu0 %746
      %v750 = vunpack.c.l.s4 839922192
      %v751 = vunpack.c.0.s8 %v750
      %v752 = vlaneseq
      %v753 = vshrl.u32 %v752, 7
      %v754 = vsub.s32 %v751, %v753
      %v755 = vrot.slane %v747, %v754
      %757 = vset.pattern.permute.xlu0 0
      %758 = vperm.xlu0 %757, %v608
      %v759 = vpop.permute.xlu0 %758
      %v762 = vunpack.c.l.s4 839922192
      %v763 = vunpack.c.0.s8 %v762
      %v764 = vlaneseq
      %v765 = vshrl.u32 %v764, 7
      %v766 = vsub.s32 %v763, %v765
      %v767 = vrot.slane %v759, %v766
      %769 = vset.pattern.permute.xlu0 0
      %770 = vperm.xlu0 %769, %v609
      %v771 = vpop.permute.xlu0 %770
      %v774 = vunpack.c.l.s4 839922192
      %v775 = vunpack.c.0.s8 %v774
      %v776 = vlaneseq
      %v777 = vshrl.u32 %v776, 7
      %v778 = vsub.s32 %v775, %v777
      %v779 = vrot.slane %v771, %v778
      %781 = vset.pattern.permute.xlu0 0
      %782 = vperm.xlu0 %781, %v610
      %v783 = vpop.permute.xlu0 %782
      %v786 = vunpack.c.l.s4 839922192
      %v787 = vunpack.c.0.s8 %v786
      %v788 = vlaneseq
      %v789 = vshrl.u32 %v788, 7
      %v790 = vsub.s32 %v787, %v789
      %v791 = vrot.slane %v783, %v790
      %793 = vset.pattern.permute.xlu0 0
      %794 = vperm.xlu0 %793, %v611
      %v795 = vpop.permute.xlu0 %794
      %v798 = vunpack.c.l.s4 839922192
      %v799 = vunpack.c.0.s8 %v798
      %v800 = vlaneseq
      %v801 = vshrl.u32 %v800, 7
      %v802 = vsub.s32 %v799, %v801
      %v803 = vrot.slane %v795, %v802
      %v820 = vunpack.c.l.b16 %v623
      %v821 = vunpack.c.l.b16 %v635
      %v822 = vunpack.c.l.b16 %v647
      %v823 = vunpack.c.l.b16 %v659
      %v824 = vunpack.c.l.b16 %v671
      %v825 = vunpack.c.l.b16 %v683
      %v826 = vunpack.c.l.b16 %v695
      %v827 = vunpack.c.l.b16 %v707
      %v828 = vunpack.c.l.b16 %v719
      %v829 = vunpack.c.l.b16 %v731
      %v830 = vunpack.c.l.b16 %v743
      %v831 = vunpack.c.l.b16 %v755
      %v832 = vunpack.c.l.b16 %v767
      %v833 = vunpack.c.l.b16 %v779
      %v834 = vunpack.c.l.b16 %v791
      %v835 = vunpack.c.l.b16 %v803
      %v836 = vpack.c.b16 %v821, %v820
      %v837 = vpack.c.b16 %v823, %v822
      %v838 = vpack.c.b16 %v825, %v824
      %v839 = vpack.c.b16 %v827, %v826
      %v840 = vpack.c.b16 %v829, %v828
      %v841 = vpack.c.b16 %v831, %v830
      %v842 = vpack.c.b16 %v833, %v832
      %v843 = vpack.c.b16 %v835, %v834
      %v852 = vadd.bf16 %v580, %v836
      %v853 = vadd.bf16 %v581, %v836
      %v854 = vadd.bf16 %v582, %v837
      %v855 = vadd.bf16 %v583, %v837
      %v856 = vadd.bf16 %v584, %v838
      %v857 = vadd.bf16 %v585, %v838
      %v858 = vadd.bf16 %v586, %v839
      %v859 = vadd.bf16 %v587, %v839
      %v860 = vadd.bf16 %v588, %v840
      %v861 = vadd.bf16 %v589, %v840
      %v862 = vadd.bf16 %v590, %v841
      %v863 = vadd.bf16 %v591, %v841
      %v864 = vadd.bf16 %v592, %v842
      %v865 = vadd.bf16 %v593, %v842
      %v866 = vadd.bf16 %v594, %v843
      %v867 = vadd.bf16 %v595, %v843
      %v868 = vmax.bf16 %v852, 0
      %v869 = vmax.bf16 %v853, 0
      %v870 = vmax.bf16 %v854, 0
      %v871 = vmax.bf16 %v855, 0
      %v872 = vmax.bf16 %v856, 0
      %v873 = vmax.bf16 %v857, 0
      %v874 = vmax.bf16 %v858, 0
      %v875 = vmax.bf16 %v859, 0
      %v876 = vmax.bf16 %v860, 0
      %v877 = vmax.bf16 %v861, 0
      %v878 = vmax.bf16 %v862, 0
      %v879 = vmax.bf16 %v863, 0
      %v880 = vmax.bf16 %v864, 0
      %v881 = vmax.bf16 %v865, 0
      %v882 = vmax.bf16 %v866, 0
      %v883 = vmax.bf16 %v867, 0
      %v884 = vld [vmem:[%s3] sm:$0xf]
      %v885 = vld [vmem:[%s3 + $0x4] sm:$0xf]
      %v886 = vld [vmem:[%s3 + $0x8] sm:$0xf]
      %v887 = vld [vmem:[%s3 + $0xc] sm:$0xf]
      %v888 = vld [vmem:[%s3 + $0x10] sm:$0xf]
      %v889 = vld [vmem:[%s3 + $0x14] sm:$0xf]
      %v890 = vld [vmem:[%s3 + $0x18] sm:$0xf]
      %v891 = vld [vmem:[%s3 + $0x1c] sm:$0xf]
      %v892 = vld [vmem:[%s3 + $0x20] sm:$0xf]
      %v893 = vld [vmem:[%s3 + $0x24] sm:$0xf]
      %v894 = vld [vmem:[%s3 + $0x28] sm:$0xf]
      %v895 = vld [vmem:[%s3 + $0x2c] sm:$0xf]
      %v896 = vld [vmem:[%s3 + $0x30] sm:$0xf]
      %v897 = vld [vmem:[%s3 + $0x34] sm:$0xf]
      %v898 = vld [vmem:[%s3 + $0x38] sm:$0xf]
      %v899 = vld [vmem:[%s3 + $0x3c] sm:$0xf]
      %v916 = vunpack.c.l.b16 %v884
      %v917 = vunpack.c.l.b16 %v885
      %v918 = vunpack.c.l.b16 %v886
      %v919 = vunpack.c.l.b16 %v887
      %v920 = vunpack.c.l.b16 %v888
      %v921 = vunpack.c.l.b16 %v889
      %v922 = vunpack.c.l.b16 %v890
      %v923 = vunpack.c.l.b16 %v891
      %v924 = vunpack.c.l.b16 %v892
      %v925 = vunpack.c.l.b16 %v893
      %v926 = vunpack.c.l.b16 %v894
      %v927 = vunpack.c.l.b16 %v895
      %v928 = vunpack.c.l.b16 %v896
      %v929 = vunpack.c.l.b16 %v897
      %v930 = vunpack.c.l.b16 %v898
      %v931 = vunpack.c.l.b16 %v899
      %v932 = vpack.c.b16 %v917, %v916
      %v933 = vpack.c.b16 %v919, %v918
      %v934 = vpack.c.b16 %v921, %v920
      %v935 = vpack.c.b16 %v923, %v922
      %v936 = vpack.c.b16 %v925, %v924
      %v937 = vpack.c.b16 %v927, %v926
      %v938 = vpack.c.b16 %v929, %v928
      %v939 = vpack.c.b16 %v931, %v930
      %948 = vmatprep.subr.bf16.mxu0 %v883
      %949 = vmatpush1.bf16.msra.mxu0 %v882
      %950 = vmatprep.subr.bf16.mxu0 %v881
      %951 = vmatpush1.bf16.msra.mxu0 %v880
      %952 = vmatprep.subr.bf16.mxu0 %v879
      %953 = vmatpush1.bf16.msra.mxu0 %v878
      %954 = vmatprep.subr.bf16.mxu0 %v877
      %955 = vmatpush1.bf16.msra.mxu0 %v876
      %956 = vmatprep.subr.bf16.mxu0 %v875
      %957 = vmatpush1.bf16.msra.mxu0 %v874
      %958 = vmatprep.subr.bf16.mxu0 %v873
      %959 = vmatpush1.bf16.msra.mxu0 %v872
      %960 = vmatprep.subr.bf16.mxu0 %v871
      %961 = vmatpush1.bf16.msra.mxu0 %v870
      %962 = vmatprep.subr.bf16.mxu0 %v869
      %963 = vmatpush1.bf16.msra.mxu0 %v868
      %964 = vmatprep.subr.bf16.mxu0 0
      %965 = vmatpush2.bf16.msra.mxu0 0
      %966 = vmatprep.subr.bf16.mxu0 0
      %967 = vmatpush2.bf16.msra.mxu0 0
      %968 = vmatprep.subr.bf16.mxu0 0
      %969 = vmatpush2.bf16.msra.mxu0 0
      %970 = vmatprep.subr.bf16.mxu0 0
      %971 = vmatpush2.bf16.msra.mxu0 0
      %972 = vmatprep.subr.bf16.mxu0 0
      %973 = vmatpush2.bf16.msra.mxu0 0
      %974 = vmatprep.subr.bf16.mxu0 0
      %975 = vmatpush2.bf16.msra.mxu0 0
      %976 = vmatprep.subr.bf16.mxu0 0
      %977 = vmatpush2.bf16.msra.mxu0 0
      %978 = vmatprep.subr.bf16.mxu0 0
      %979 = vmatpush2.bf16.msra.mxu0 0
      %980 = vmatprep.mubr.bf16.mxu0 0
      %981 = vmatmul.mubr.bf16.gmra.mxu0 %v932
      %v982 = vpop.f32.mrf.mxu0
      %v983 = vadd.f32 0.0, %v982
      %v984 = vpop.f32.mrf.mxu0
      %v985 = vadd.f32 0.0, %v984
      %v986 = vpop.f32.mrf.mxu0
      %v987 = vadd.f32 0.0, %v986
      %v988 = vpop.f32.mrf.mxu0
      %v989 = vadd.f32 0.0, %v988
      %990 = vmatprep.mubr.bf16.mxu0 0
      %991 = vmatmul.mubr.bf16.gmra.mxu0 %v933
      %v992 = vpop.f32.mrf.mxu0
      %v993 = vadd.f32 0.0, %v992
      %v994 = vpop.f32.mrf.mxu0
      %v995 = vadd.f32 0.0, %v994
      %v996 = vpop.f32.mrf.mxu0
      %v997 = vadd.f32 0.0, %v996
      %v998 = vpop.f32.mrf.mxu0
      %v999 = vadd.f32 0.0, %v998
      %1000 = vmatprep.mubr.bf16.mxu0 0
      %1001 = vmatmul.mubr.bf16.gmra.mxu0 %v934
      %v1002 = vpop.f32.mrf.mxu0
      %v1003 = vadd.f32 0.0, %v1002
      %v1004 = vpop.f32.mrf.mxu0
      %v1005 = vadd.f32 0.0, %v1004
      %v1006 = vpop.f32.mrf.mxu0
      %v1007 = vadd.f32 0.0, %v1006
      %v1008 = vpop.f32.mrf.mxu0
      %v1009 = vadd.f32 0.0, %v1008
      %1010 = vmatprep.mubr.bf16.mxu0 0
      %1011 = vmatmul.mubr.bf16.gmra.mxu0 %v935
      %v1012 = vpop.f32.mrf.mxu0
      %v1013 = vadd.f32 0.0, %v1012
      %v1014 = vpop.f32.mrf.mxu0
      %v1015 = vadd.f32 0.0, %v1014
      %v1016 = vpop.f32.mrf.mxu0
      %v1017 = vadd.f32 0.0, %v1016
      %v1018 = vpop.f32.mrf.mxu0
      %v1019 = vadd.f32 0.0, %v1018
      %1020 = vmatprep.mubr.bf16.mxu0 0
      %1021 = vmatmul.mubr.bf16.gmra.mxu0 %v936
      %v1022 = vpop.f32.mrf.mxu0
      %v1023 = vadd.f32 0.0, %v1022
      %v1024 = vpop.f32.mrf.mxu0
      %v1025 = vadd.f32 0.0, %v1024
      %v1026 = vpop.f32.mrf.mxu0
      %v1027 = vadd.f32 0.0, %v1026
      %v1028 = vpop.f32.mrf.mxu0
      %v1029 = vadd.f32 0.0, %v1028
      %1030 = vmatprep.mubr.bf16.mxu0 0
      %1031 = vmatmul.mubr.bf16.gmra.mxu0 %v937
      %v1032 = vpop.f32.mrf.mxu0
      %v1033 = vadd.f32 0.0, %v1032
      %v1034 = vpop.f32.mrf.mxu0
      %v1035 = vadd.f32 0.0, %v1034
      %v1036 = vpop.f32.mrf.mxu0
      %v1037 = vadd.f32 0.0, %v1036
      %v1038 = vpop.f32.mrf.mxu0
      %v1039 = vadd.f32 0.0, %v1038
      %1040 = vmatprep.mubr.bf16.mxu0 0
      %1041 = vmatmul.mubr.bf16.gmra.mxu0 %v938
      %v1042 = vpop.f32.mrf.mxu0
      %v1043 = vadd.f32 0.0, %v1042
      %v1044 = vpop.f32.mrf.mxu0
      %v1045 = vadd.f32 0.0, %v1044
      %v1046 = vpop.f32.mrf.mxu0
      %v1047 = vadd.f32 0.0, %v1046
      %v1048 = vpop.f32.mrf.mxu0
      %v1049 = vadd.f32 0.0, %v1048
      %1050 = vmatprep.mubr.bf16.mxu0 0
      %1051 = vmatmul.mubr.bf16.gmra.mxu0 %v939
      %v1052 = vpop.f32.mrf.mxu0
      %v1053 = vadd.f32 0.0, %v1052
      %v1054 = vpop.f32.mrf.mxu0
      %v1055 = vadd.f32 0.0, %v1054
      %v1056 = vpop.f32.mrf.mxu0
      %v1057 = vadd.f32 0.0, %v1056
      %v1058 = vpop.f32.mrf.mxu0
      %v1059 = vadd.f32 0.0, %v1058
      %1060 = vdwg.mxu0
      %v1061 = vpack.c.bf16 %v987, %v983
      %v1062 = vpack.c.bf16 %v989, %v985
      %v1063 = vpack.c.bf16 %v997, %v993
      %v1064 = vpack.c.bf16 %v999, %v995
      %v1065 = vpack.c.bf16 %v1007, %v1003
      %v1066 = vpack.c.bf16 %v1009, %v1005
      %v1067 = vpack.c.bf16 %v1017, %v1013
      %v1068 = vpack.c.bf16 %v1019, %v1015
      %v1069 = vpack.c.bf16 %v1027, %v1023
      %v1070 = vpack.c.bf16 %v1029, %v1025
      %v1071 = vpack.c.bf16 %v1037, %v1033
      %v1072 = vpack.c.bf16 %v1039, %v1035
      %v1073 = vpack.c.bf16 %v1047, %v1043
      %v1074 = vpack.c.bf16 %v1049, %v1045
      %v1075 = vpack.c.bf16 %v1057, %v1053
      %v1076 = vpack.c.bf16 %v1059, %v1055
      %v1077 = vld [vmem:[%s4] sm:$0xf]
      %v1078 = vld [vmem:[%s4 + $0x4] sm:$0xf]
      %v1079 = vld [vmem:[%s4 + $0x8] sm:$0xf]
      %v1080 = vld [vmem:[%s4 + $0xc] sm:$0xf]
      %v1081 = vld [vmem:[%s4 + $0x10] sm:$0xf]
      %v1082 = vld [vmem:[%s4 + $0x14] sm:$0xf]
      %v1083 = vld [vmem:[%s4 + $0x18] sm:$0xf]
      %v1084 = vld [vmem:[%s4 + $0x1c] sm:$0xf]
      %v1085 = vld [vmem:[%s4 + $0x20] sm:$0xf]
      %v1086 = vld [vmem:[%s4 + $0x24] sm:$0xf]
      %v1087 = vld [vmem:[%s4 + $0x28] sm:$0xf]
      %v1088 = vld [vmem:[%s4 + $0x2c] sm:$0xf]
      %v1089 = vld [vmem:[%s4 + $0x30] sm:$0xf]
      %v1090 = vld [vmem:[%s4 + $0x34] sm:$0xf]
      %v1091 = vld [vmem:[%s4 + $0x38] sm:$0xf]
      %v1092 = vld [vmem:[%s4 + $0x3c] sm:$0xf]
      %1094 = vset.pattern.permute.xlu0 0
      %1095 = vperm.xlu0 %1094, %v1077
      %v1096 = vpop.permute.xlu0 %1095
      %v1099 = vunpack.c.l.s4 839922192
      %v1100 = vunpack.c.0.s8 %v1099
      %v1101 = vlaneseq
      %v1102 = vshrl.u32 %v1101, 7
      %v1103 = vsub.s32 %v1100, %v1102
      %v1104 = vrot.slane %v1096, %v1103
      %1106 = vset.pattern.permute.xlu0 0
      %1107 = vperm.xlu0 %1106, %v1078
      %v1108 = vpop.permute.xlu0 %1107
      %v1111 = vunpack.c.l.s4 839922192
      %v1112 = vunpack.c.0.s8 %v1111
      %v1113 = vlaneseq
      %v1114 = vshrl.u32 %v1113, 7
      %v1115 = vsub.s32 %v1112, %v1114
      %v1116 = vrot.slane %v1108, %v1115
      %1118 = vset.pattern.permute.xlu0 0
      %1119 = vperm.xlu0 %1118, %v1079
      %v1120 = vpop.permute.xlu0 %1119
      %v1123 = vunpack.c.l.s4 839922192
      %v1124 = vunpack.c.0.s8 %v1123
      %v1125 = vlaneseq
      %v1126 = vshrl.u32 %v1125, 7
      %v1127 = vsub.s32 %v1124, %v1126
      %v1128 = vrot.slane %v1120, %v1127
      %1130 = vset.pattern.permute.xlu0 0
      %1131 = vperm.xlu0 %1130, %v1080
      %v1132 = vpop.permute.xlu0 %1131
      %v1135 = vunpack.c.l.s4 839922192
      %v1136 = vunpack.c.0.s8 %v1135
      %v1137 = vlaneseq
      %v1138 = vshrl.u32 %v1137, 7
      %v1139 = vsub.s32 %v1136, %v1138
      %v1140 = vrot.slane %v1132, %v1139
      %1142 = vset.pattern.permute.xlu0 0
      %1143 = vperm.xlu0 %1142, %v1081
      %v1144 = vpop.permute.xlu0 %1143
      %v1147 = vunpack.c.l.s4 839922192
      %v1148 = vunpack.c.0.s8 %v1147
      %v1149 = vlaneseq
      %v1150 = vshrl.u32 %v1149, 7
      %v1151 = vsub.s32 %v1148, %v1150
      %v1152 = vrot.slane %v1144, %v1151
      %1154 = vset.pattern.permute.xlu0 0
      %1155 = vperm.xlu0 %1154, %v1082
      %v1156 = vpop.permute.xlu0 %1155
      %v1159 = vunpack.c.l.s4 839922192
      %v1160 = vunpack.c.0.s8 %v1159
      %v1161 = vlaneseq
      %v1162 = vshrl.u32 %v1161, 7
      %v1163 = vsub.s32 %v1160, %v1162
      %v1164 = vrot.slane %v1156, %v1163
      %1166 = vset.pattern.permute.xlu0 0
      %1167 = vperm.xlu0 %1166, %v1083
      %v1168 = vpop.permute.xlu0 %1167
      %v1171 = vunpack.c.l.s4 839922192
      %v1172 = vunpack.c.0.s8 %v1171
      %v1173 = vlaneseq
      %v1174 = vshrl.u32 %v1173, 7
      %v1175 = vsub.s32 %v1172, %v1174
      %v1176 = vrot.slane %v1168, %v1175
      %1178 = vset.pattern.permute.xlu0 0
      %1179 = vperm.xlu0 %1178, %v1084
      %v1180 = vpop.permute.xlu0 %1179
      %v1183 = vunpack.c.l.s4 839922192
      %v1184 = vunpack.c.0.s8 %v1183
      %v1185 = vlaneseq
      %v1186 = vshrl.u32 %v1185, 7
      %v1187 = vsub.s32 %v1184, %v1186
      %v1188 = vrot.slane %v1180, %v1187
      %1190 = vset.pattern.permute.xlu0 0
      %1191 = vperm.xlu0 %1190, %v1085
      %v1192 = vpop.permute.xlu0 %1191
      %v1195 = vunpack.c.l.s4 839922192
      %v1196 = vunpack.c.0.s8 %v1195
      %v1197 = vlaneseq
      %v1198 = vshrl.u32 %v1197, 7
      %v1199 = vsub.s32 %v1196, %v1198
      %v1200 = vrot.slane %v1192, %v1199
      %1202 = vset.pattern.permute.xlu0 0
      %1203 = vperm.xlu0 %1202, %v1086
      %v1204 = vpop.permute.xlu0 %1203
      %v1207 = vunpack.c.l.s4 839922192
      %v1208 = vunpack.c.0.s8 %v1207
      %v1209 = vlaneseq
      %v1210 = vshrl.u32 %v1209, 7
      %v1211 = vsub.s32 %v1208, %v1210
      %v1212 = vrot.slane %v1204, %v1211
      %1214 = vset.pattern.permute.xlu0 0
      %1215 = vperm.xlu0 %1214, %v1087
      %v1216 = vpop.permute.xlu0 %1215
      %v1219 = vunpack.c.l.s4 839922192
      %v1220 = vunpack.c.0.s8 %v1219
      %v1221 = vlaneseq
      %v1222 = vshrl.u32 %v1221, 7
      %v1223 = vsub.s32 %v1220, %v1222
      %v1224 = vrot.slane %v1216, %v1223
      %1226 = vset.pattern.permute.xlu0 0
      %1227 = vperm.xlu0 %1226, %v1088
      %v1228 = vpop.permute.xlu0 %1227
      %v1231 = vunpack.c.l.s4 839922192
      %v1232 = vunpack.c.0.s8 %v1231
      %v1233 = vlaneseq
      %v1234 = vshrl.u32 %v1233, 7
      %v1235 = vsub.s32 %v1232, %v1234
      %v1236 = vrot.slane %v1228, %v1235
      %1238 = vset.pattern.permute.xlu0 0
      %1239 = vperm.xlu0 %1238, %v1089
      %v1240 = vpop.permute.xlu0 %1239
      %v1243 = vunpack.c.l.s4 839922192
      %v1244 = vunpack.c.0.s8 %v1243
      %v1245 = vlaneseq
      %v1246 = vshrl.u32 %v1245, 7
      %v1247 = vsub.s32 %v1244, %v1246
      %v1248 = vrot.slane %v1240, %v1247
      %1250 = vset.pattern.permute.xlu0 0
      %1251 = vperm.xlu0 %1250, %v1090
      %v1252 = vpop.permute.xlu0 %1251
      %v1255 = vunpack.c.l.s4 839922192
      %v1256 = vunpack.c.0.s8 %v1255
      %v1257 = vlaneseq
      %v1258 = vshrl.u32 %v1257, 7
      %v1259 = vsub.s32 %v1256, %v1258
      %v1260 = vrot.slane %v1252, %v1259
      %1262 = vset.pattern.permute.xlu0 0
      %1263 = vperm.xlu0 %1262, %v1091
      %v1264 = vpop.permute.xlu0 %1263
      %v1267 = vunpack.c.l.s4 839922192
      %v1268 = vunpack.c.0.s8 %v1267
      %v1269 = vlaneseq
      %v1270 = vshrl.u32 %v1269, 7
      %v1271 = vsub.s32 %v1268, %v1270
      %v1272 = vrot.slane %v1264, %v1271
      %1274 = vset.pattern.permute.xlu0 0
      %1275 = vperm.xlu0 %1274, %v1092
      %v1276 = vpop.permute.xlu0 %1275
      %v1279 = vunpack.c.l.s4 839922192
      %v1280 = vunpack.c.0.s8 %v1279
      %v1281 = vlaneseq
      %v1282 = vshrl.u32 %v1281, 7
      %v1283 = vsub.s32 %v1280, %v1282
      %v1284 = vrot.slane %v1276, %v1283
      %v1301 = vunpack.c.l.b16 %v1104
      %v1302 = vunpack.c.l.b16 %v1116
      %v1303 = vunpack.c.l.b16 %v1128
      %v1304 = vunpack.c.l.b16 %v1140
      %v1305 = vunpack.c.l.b16 %v1152
      %v1306 = vunpack.c.l.b16 %v1164
      %v1307 = vunpack.c.l.b16 %v1176
      %v1308 = vunpack.c.l.b16 %v1188
      %v1309 = vunpack.c.l.b16 %v1200
      %v1310 = vunpack.c.l.b16 %v1212
      %v1311 = vunpack.c.l.b16 %v1224
      %v1312 = vunpack.c.l.b16 %v1236
      %v1313 = vunpack.c.l.b16 %v1248
      %v1314 = vunpack.c.l.b16 %v1260
      %v1315 = vunpack.c.l.b16 %v1272
      %v1316 = vunpack.c.l.b16 %v1284
      %v1317 = vpack.c.b16 %v1302, %v1301
      %v1318 = vpack.c.b16 %v1304, %v1303
      %v1319 = vpack.c.b16 %v1306, %v1305
      %v1320 = vpack.c.b16 %v1308, %v1307
      %v1321 = vpack.c.b16 %v1310, %v1309
      %v1322 = vpack.c.b16 %v1312, %v1311
      %v1323 = vpack.c.b16 %v1314, %v1313
      %v1324 = vpack.c.b16 %v1316, %v1315
      %v1333 = vadd.bf16 %v1061, %v1317
      %v1334 = vadd.bf16 %v1062, %v1317
      %v1335 = vadd.bf16 %v1063, %v1318
      %v1336 = vadd.bf16 %v1064, %v1318
      %v1337 = vadd.bf16 %v1065, %v1319
      %v1338 = vadd.bf16 %v1066, %v1319
      %v1339 = vadd.bf16 %v1067, %v1320
      %v1340 = vadd.bf16 %v1068, %v1320
      %v1341 = vadd.bf16 %v1069, %v1321
      %v1342 = vadd.bf16 %v1070, %v1321
      %v1343 = vadd.bf16 %v1071, %v1322
      %v1344 = vadd.bf16 %v1072, %v1322
      %v1345 = vadd.bf16 %v1073, %v1323
      %v1346 = vadd.bf16 %v1074, %v1323
      %v1347 = vadd.bf16 %v1075, %v1324
      %v1348 = vadd.bf16 %v1076, %v1324
      %v1349 = vmax.bf16 %v1333, 0
      %v1350 = vmax.bf16 %v1334, 0
      %v1351 = vmax.bf16 %v1335, 0
      %v1352 = vmax.bf16 %v1336, 0
      %v1353 = vmax.bf16 %v1337, 0
      %v1354 = vmax.bf16 %v1338, 0
      %v1355 = vmax.bf16 %v1339, 0
      %v1356 = vmax.bf16 %v1340, 0
      %v1357 = vmax.bf16 %v1341, 0
      %v1358 = vmax.bf16 %v1342, 0
      %v1359 = vmax.bf16 %v1343, 0
      %v1360 = vmax.bf16 %v1344, 0
      %v1361 = vmax.bf16 %v1345, 0
      %v1362 = vmax.bf16 %v1346, 0
      %v1363 = vmax.bf16 %v1347, 0
      %v1364 = vmax.bf16 %v1348, 0
      %v1365 = vld [vmem:[%s5] sm:$0xf]
      %v1366 = vld [vmem:[%s5 + $0x4] sm:$0xf]
      %v1367 = vld [vmem:[%s5 + $0x8] sm:$0xf]
      %v1368 = vld [vmem:[%s5 + $0xc] sm:$0xf]
      %v1369 = vld [vmem:[%s5 + $0x10] sm:$0xf]
      %v1370 = vld [vmem:[%s5 + $0x14] sm:$0xf]
      %v1371 = vld [vmem:[%s5 + $0x18] sm:$0xf]
      %v1372 = vld [vmem:[%s5 + $0x1c] sm:$0xf]
      %v1373 = vld [vmem:[%s5 + $0x20] sm:$0xf]
      %v1374 = vld [vmem:[%s5 + $0x24] sm:$0xf]
      %v1375 = vld [vmem:[%s5 + $0x28] sm:$0xf]
      %v1376 = vld [vmem:[%s5 + $0x2c] sm:$0xf]
      %v1377 = vld [vmem:[%s5 + $0x30] sm:$0xf]
      %v1378 = vld [vmem:[%s5 + $0x34] sm:$0xf]
      %v1379 = vld [vmem:[%s5 + $0x38] sm:$0xf]
      %v1380 = vld [vmem:[%s5 + $0x3c] sm:$0xf]
      %v1397 = vunpack.c.l.b16 %v1365
      %v1398 = vunpack.c.l.b16 %v1366
      %v1399 = vunpack.c.l.b16 %v1367
      %v1400 = vunpack.c.l.b16 %v1368
      %v1401 = vunpack.c.l.b16 %v1369
      %v1402 = vunpack.c.l.b16 %v1370
      %v1403 = vunpack.c.l.b16 %v1371
      %v1404 = vunpack.c.l.b16 %v1372
      %v1405 = vunpack.c.l.b16 %v1373
      %v1406 = vunpack.c.l.b16 %v1374
      %v1407 = vunpack.c.l.b16 %v1375
      %v1408 = vunpack.c.l.b16 %v1376
      %v1409 = vunpack.c.l.b16 %v1377
      %v1410 = vunpack.c.l.b16 %v1378
      %v1411 = vunpack.c.l.b16 %v1379
      %v1412 = vunpack.c.l.b16 %v1380
      %v1413 = vpack.c.b16 %v1398, %v1397
      %v1414 = vpack.c.b16 %v1400, %v1399
      %v1415 = vpack.c.b16 %v1402, %v1401
      %v1416 = vpack.c.b16 %v1404, %v1403
      %v1417 = vpack.c.b16 %v1406, %v1405
      %v1418 = vpack.c.b16 %v1408, %v1407
      %v1419 = vpack.c.b16 %v1410, %v1409
      %v1420 = vpack.c.b16 %v1412, %v1411
      %1429 = vmatprep.subr.bf16.mxu0 %v1364
      %1430 = vmatpush1.bf16.msra.mxu0 %v1363
      %1431 = vmatprep.subr.bf16.mxu0 %v1362
      %1432 = vmatpush1.bf16.msra.mxu0 %v1361
      %1433 = vmatprep.subr.bf16.mxu0 %v1360
      %1434 = vmatpush1.bf16.msra.mxu0 %v1359
      %1435 = vmatprep.subr.bf16.mxu0 %v1358
      %1436 = vmatpush1.bf16.msra.mxu0 %v1357
      %1437 = vmatprep.subr.bf16.mxu0 %v1356
      %1438 = vmatpush1.bf16.msra.mxu0 %v1355
      %1439 = vmatprep.subr.bf16.mxu0 %v1354
      %1440 = vmatpush1.bf16.msra.mxu0 %v1353
      %1441 = vmatprep.subr.bf16.mxu0 %v1352
      %1442 = vmatpush1.bf16.msra.mxu0 %v1351
      %1443 = vmatprep.subr.bf16.mxu0 %v1350
      %1444 = vmatpush1.bf16.msra.mxu0 %v1349
      %1445 = vmatprep.subr.bf16.mxu0 0
      %1446 = vmatpush2.bf16.msra.mxu0 0
      %1447 = vmatprep.subr.bf16.mxu0 0
      %1448 = vmatpush2.bf16.msra.mxu0 0
      %1449 = vmatprep.subr.bf16.mxu0 0
      %1450 = vmatpush2.bf16.msra.mxu0 0
      %1451 = vmatprep.subr.bf16.mxu0 0
      %1452 = vmatpush2.bf16.msra.mxu0 0
      %1453 = vmatprep.subr.bf16.mxu0 0
      %1454 = vmatpush2.bf16.msra.mxu0 0
      %1455 = vmatprep.subr.bf16.mxu0 0
      %1456 = vmatpush2.bf16.msra.mxu0 0
      %1457 = vmatprep.subr.bf16.mxu0 0
      %1458 = vmatpush2.bf16.msra.mxu0 0
      %1459 = vmatprep.subr.bf16.mxu0 0
      %1460 = vmatpush2.bf16.msra.mxu0 0
      %1461 = vmatprep.mubr.bf16.mxu0 0
      %1462 = vmatmul.mubr.bf16.gmra.mxu0 %v1413
      %v1463 = vpop.f32.mrf.mxu0
      %v1464 = vadd.f32 0.0, %v1463
      %v1465 = vpop.f32.mrf.mxu0
      %v1466 = vadd.f32 0.0, %v1465
      %v1467 = vpop.f32.mrf.mxu0
      %v1468 = vadd.f32 0.0, %v1467
      %v1469 = vpop.f32.mrf.mxu0
      %v1470 = vadd.f32 0.0, %v1469
      %1471 = vmatprep.mubr.bf16.mxu0 0
      %1472 = vmatmul.mubr.bf16.gmra.mxu0 %v1414
      %v1473 = vpop.f32.mrf.mxu0
      %v1474 = vadd.f32 0.0, %v1473
      %v1475 = vpop.f32.mrf.mxu0
      %v1476 = vadd.f32 0.0, %v1475
      %v1477 = vpop.f32.mrf.mxu0
      %v1478 = vadd.f32 0.0, %v1477
      %v1479 = vpop.f32.mrf.mxu0
      %v1480 = vadd.f32 0.0, %v1479
      %1481 = vmatprep.mubr.bf16.mxu0 0
      %1482 = vmatmul.mubr.bf16.gmra.mxu0 %v1415
      %v1483 = vpop.f32.mrf.mxu0
      %v1484 = vadd.f32 0.0, %v1483
      %v1485 = vpop.f32.mrf.mxu0
      %v1486 = vadd.f32 0.0, %v1485
      %v1487 = vpop.f32.mrf.mxu0
      %v1488 = vadd.f32 0.0, %v1487
      %v1489 = vpop.f32.mrf.mxu0
      %v1490 = vadd.f32 0.0, %v1489
      %1491 = vmatprep.mubr.bf16.mxu0 0
      %1492 = vmatmul.mubr.bf16.gmra.mxu0 %v1416
      %v1493 = vpop.f32.mrf.mxu0
      %v1494 = vadd.f32 0.0, %v1493
      %v1495 = vpop.f32.mrf.mxu0
      %v1496 = vadd.f32 0.0, %v1495
      %v1497 = vpop.f32.mrf.mxu0
      %v1498 = vadd.f32 0.0, %v1497
      %v1499 = vpop.f32.mrf.mxu0
      %v1500 = vadd.f32 0.0, %v1499
      %1501 = vmatprep.mubr.bf16.mxu0 0
      %1502 = vmatmul.mubr.bf16.gmra.mxu0 %v1417
      %v1503 = vpop.f32.mrf.mxu0
      %v1504 = vadd.f32 0.0, %v1503
      %v1505 = vpop.f32.mrf.mxu0
      %v1506 = vadd.f32 0.0, %v1505
      %v1507 = vpop.f32.mrf.mxu0
      %v1508 = vadd.f32 0.0, %v1507
      %v1509 = vpop.f32.mrf.mxu0
      %v1510 = vadd.f32 0.0, %v1509
      %1511 = vmatprep.mubr.bf16.mxu0 0
      %1512 = vmatmul.mubr.bf16.gmra.mxu0 %v1418
      %v1513 = vpop.f32.mrf.mxu0
      %v1514 = vadd.f32 0.0, %v1513
      %v1515 = vpop.f32.mrf.mxu0
      %v1516 = vadd.f32 0.0, %v1515
      %v1517 = vpop.f32.mrf.mxu0
      %v1518 = vadd.f32 0.0, %v1517
      %v1519 = vpop.f32.mrf.mxu0
      %v1520 = vadd.f32 0.0, %v1519
      %1521 = vmatprep.mubr.bf16.mxu0 0
      %1522 = vmatmul.mubr.bf16.gmra.mxu0 %v1419
      %v1523 = vpop.f32.mrf.mxu0
      %v1524 = vadd.f32 0.0, %v1523
      %v1525 = vpop.f32.mrf.mxu0
      %v1526 = vadd.f32 0.0, %v1525
      %v1527 = vpop.f32.mrf.mxu0
      %v1528 = vadd.f32 0.0, %v1527
      %v1529 = vpop.f32.mrf.mxu0
      %v1530 = vadd.f32 0.0, %v1529
      %1531 = vmatprep.mubr.bf16.mxu0 0
      %1532 = vmatmul.mubr.bf16.gmra.mxu0 %v1420
      %v1533 = vpop.f32.mrf.mxu0
      %v1534 = vadd.f32 0.0, %v1533
      %v1535 = vpop.f32.mrf.mxu0
      %v1536 = vadd.f32 0.0, %v1535
      %v1537 = vpop.f32.mrf.mxu0
      %v1538 = vadd.f32 0.0, %v1537
      %v1539 = vpop.f32.mrf.mxu0
      %v1540 = vadd.f32 0.0, %v1539
      %1541 = vdwg.mxu0
      %v1542 = vpack.c.bf16 %v1468, %v1464
      %v1543 = vpack.c.bf16 %v1470, %v1466
      %v1544 = vpack.c.bf16 %v1478, %v1474
      %v1545 = vpack.c.bf16 %v1480, %v1476
      %v1546 = vpack.c.bf16 %v1488, %v1484
      %v1547 = vpack.c.bf16 %v1490, %v1486
      %v1548 = vpack.c.bf16 %v1498, %v1494
      %v1549 = vpack.c.bf16 %v1500, %v1496
      %v1550 = vpack.c.bf16 %v1508, %v1504
      %v1551 = vpack.c.bf16 %v1510, %v1506
      %v1552 = vpack.c.bf16 %v1518, %v1514
      %v1553 = vpack.c.bf16 %v1520, %v1516
      %v1554 = vpack.c.bf16 %v1528, %v1524
      %v1555 = vpack.c.bf16 %v1530, %v1526
      %v1556 = vpack.c.bf16 %v1538, %v1534
      %v1557 = vpack.c.bf16 %v1540, %v1536
      %v1558 = vld [vmem:[%s6] sm:$0xf]
      %v1559 = vld [vmem:[%s6 + $0x4] sm:$0xf]
      %v1560 = vld [vmem:[%s6 + $0x8] sm:$0xf]
      %v1561 = vld [vmem:[%s6 + $0xc] sm:$0xf]
      %v1562 = vld [vmem:[%s6 + $0x10] sm:$0xf]
      %v1563 = vld [vmem:[%s6 + $0x14] sm:$0xf]
      %v1564 = vld [vmem:[%s6 + $0x18] sm:$0xf]
      %v1565 = vld [vmem:[%s6 + $0x1c] sm:$0xf]
      %v1566 = vld [vmem:[%s6 + $0x20] sm:$0xf]
      %v1567 = vld [vmem:[%s6 + $0x24] sm:$0xf]
      %v1568 = vld [vmem:[%s6 + $0x28] sm:$0xf]
      %v1569 = vld [vmem:[%s6 + $0x2c] sm:$0xf]
      %v1570 = vld [vmem:[%s6 + $0x30] sm:$0xf]
      %v1571 = vld [vmem:[%s6 + $0x34] sm:$0xf]
      %v1572 = vld [vmem:[%s6 + $0x38] sm:$0xf]
      %v1573 = vld [vmem:[%s6 + $0x3c] sm:$0xf]
      %1575 = vset.pattern.permute.xlu0 0
      %1576 = vperm.xlu0 %1575, %v1558
      %v1577 = vpop.permute.xlu0 %1576
      %v1580 = vunpack.c.l.s4 839922192
      %v1581 = vunpack.c.0.s8 %v1580
      %v1582 = vlaneseq
      %v1583 = vshrl.u32 %v1582, 7
      %v1584 = vsub.s32 %v1581, %v1583
      %v1585 = vrot.slane %v1577, %v1584
      %1587 = vset.pattern.permute.xlu0 0
      %1588 = vperm.xlu0 %1587, %v1559
      %v1589 = vpop.permute.xlu0 %1588
      %v1592 = vunpack.c.l.s4 839922192
      %v1593 = vunpack.c.0.s8 %v1592
      %v1594 = vlaneseq
      %v1595 = vshrl.u32 %v1594, 7
      %v1596 = vsub.s32 %v1593, %v1595
      %v1597 = vrot.slane %v1589, %v1596
      %1599 = vset.pattern.permute.xlu0 0
      %1600 = vperm.xlu0 %1599, %v1560
      %v1601 = vpop.permute.xlu0 %1600
      %v1604 = vunpack.c.l.s4 839922192
      %v1605 = vunpack.c.0.s8 %v1604
      %v1606 = vlaneseq
      %v1607 = vshrl.u32 %v1606, 7
      %v1608 = vsub.s32 %v1605, %v1607
      %v1609 = vrot.slane %v1601, %v1608
      %1611 = vset.pattern.permute.xlu0 0
      %1612 = vperm.xlu0 %1611, %v1561
      %v1613 = vpop.permute.xlu0 %1612
      %v1616 = vunpack.c.l.s4 839922192
      %v1617 = vunpack.c.0.s8 %v1616
      %v1618 = vlaneseq
      %v1619 = vshrl.u32 %v1618, 7
      %v1620 = vsub.s32 %v1617, %v1619
      %v1621 = vrot.slane %v1613, %v1620
      %1623 = vset.pattern.permute.xlu0 0
      %1624 = vperm.xlu0 %1623, %v1562
      %v1625 = vpop.permute.xlu0 %1624
      %v1628 = vunpack.c.l.s4 839922192
      %v1629 = vunpack.c.0.s8 %v1628
      %v1630 = vlaneseq
      %v1631 = vshrl.u32 %v1630, 7
      %v1632 = vsub.s32 %v1629, %v1631
      %v1633 = vrot.slane %v1625, %v1632
      %1635 = vset.pattern.permute.xlu0 0
      %1636 = vperm.xlu0 %1635, %v1563
      %v1637 = vpop.permute.xlu0 %1636
      %v1640 = vunpack.c.l.s4 839922192
      %v1641 = vunpack.c.0.s8 %v1640
      %v1642 = vlaneseq
      %v1643 = vshrl.u32 %v1642, 7
      %v1644 = vsub.s32 %v1641, %v1643
      %v1645 = vrot.slane %v1637, %v1644
      %1647 = vset.pattern.permute.xlu0 0
      %1648 = vperm.xlu0 %1647, %v1564
      %v1649 = vpop.permute.xlu0 %1648
      %v1652 = vunpack.c.l.s4 839922192
      %v1653 = vunpack.c.0.s8 %v1652
      %v1654 = vlaneseq
      %v1655 = vshrl.u32 %v1654, 7
      %v1656 = vsub.s32 %v1653, %v1655
      %v1657 = vrot.slane %v1649, %v1656
      %1659 = vset.pattern.permute.xlu0 0
      %1660 = vperm.xlu0 %1659, %v1565
      %v1661 = vpop.permute.xlu0 %1660
      %v1664 = vunpack.c.l.s4 839922192
      %v1665 = vunpack.c.0.s8 %v1664
      %v1666 = vlaneseq
      %v1667 = vshrl.u32 %v1666, 7
      %v1668 = vsub.s32 %v1665, %v1667
      %v1669 = vrot.slane %v1661, %v1668
      %1671 = vset.pattern.permute.xlu0 0
      %1672 = vperm.xlu0 %1671, %v1566
      %v1673 = vpop.permute.xlu0 %1672
      %v1676 = vunpack.c.l.s4 839922192
      %v1677 = vunpack.c.0.s8 %v1676
      %v1678 = vlaneseq
      %v1679 = vshrl.u32 %v1678, 7
      %v1680 = vsub.s32 %v1677, %v1679
      %v1681 = vrot.slane %v1673, %v1680
      %1683 = vset.pattern.permute.xlu0 0
      %1684 = vperm.xlu0 %1683, %v1567
      %v1685 = vpop.permute.xlu0 %1684
      %v1688 = vunpack.c.l.s4 839922192
      %v1689 = vunpack.c.0.s8 %v1688
      %v1690 = vlaneseq
      %v1691 = vshrl.u32 %v1690, 7
      %v1692 = vsub.s32 %v1689, %v1691
      %v1693 = vrot.slane %v1685, %v1692
      %1695 = vset.pattern.permute.xlu0 0
      %1696 = vperm.xlu0 %1695, %v1568
      %v1697 = vpop.permute.xlu0 %1696
      %v1700 = vunpack.c.l.s4 839922192
      %v1701 = vunpack.c.0.s8 %v1700
      %v1702 = vlaneseq
      %v1703 = vshrl.u32 %v1702, 7
      %v1704 = vsub.s32 %v1701, %v1703
      %v1705 = vrot.slane %v1697, %v1704
      %1707 = vset.pattern.permute.xlu0 0
      %1708 = vperm.xlu0 %1707, %v1569
      %v1709 = vpop.permute.xlu0 %1708
      %v1712 = vunpack.c.l.s4 839922192
      %v1713 = vunpack.c.0.s8 %v1712
      %v1714 = vlaneseq
      %v1715 = vshrl.u32 %v1714, 7
      %v1716 = vsub.s32 %v1713, %v1715
      %v1717 = vrot.slane %v1709, %v1716
      %1719 = vset.pattern.permute.xlu0 0
      %1720 = vperm.xlu0 %1719, %v1570
      %v1721 = vpop.permute.xlu0 %1720
      %v1724 = vunpack.c.l.s4 839922192
      %v1725 = vunpack.c.0.s8 %v1724
      %v1726 = vlaneseq
      %v1727 = vshrl.u32 %v1726, 7
      %v1728 = vsub.s32 %v1725, %v1727
      %v1729 = vrot.slane %v1721, %v1728
      %1731 = vset.pattern.permute.xlu0 0
      %1732 = vperm.xlu0 %1731, %v1571
      %v1733 = vpop.permute.xlu0 %1732
      %v1736 = vunpack.c.l.s4 839922192
      %v1737 = vunpack.c.0.s8 %v1736
      %v1738 = vlaneseq
      %v1739 = vshrl.u32 %v1738, 7
      %v1740 = vsub.s32 %v1737, %v1739
      %v1741 = vrot.slane %v1733, %v1740
      %1743 = vset.pattern.permute.xlu0 0
      %1744 = vperm.xlu0 %1743, %v1572
      %v1745 = vpop.permute.xlu0 %1744
      %v1748 = vunpack.c.l.s4 839922192
      %v1749 = vunpack.c.0.s8 %v1748
      %v1750 = vlaneseq
      %v1751 = vshrl.u32 %v1750, 7
      %v1752 = vsub.s32 %v1749, %v1751
      %v1753 = vrot.slane %v1745, %v1752
      %1755 = vset.pattern.permute.xlu0 0
      %1756 = vperm.xlu0 %1755, %v1573
      %v1757 = vpop.permute.xlu0 %1756
      %v1760 = vunpack.c.l.s4 839922192
      %v1761 = vunpack.c.0.s8 %v1760
      %v1762 = vlaneseq
      %v1763 = vshrl.u32 %v1762, 7
      %v1764 = vsub.s32 %v1761, %v1763
      %v1765 = vrot.slane %v1757, %v1764
      %v1782 = vunpack.c.l.b16 %v1585
      %v1783 = vunpack.c.l.b16 %v1597
      %v1784 = vunpack.c.l.b16 %v1609
      %v1785 = vunpack.c.l.b16 %v1621
      %v1786 = vunpack.c.l.b16 %v1633
      %v1787 = vunpack.c.l.b16 %v1645
      %v1788 = vunpack.c.l.b16 %v1657
      %v1789 = vunpack.c.l.b16 %v1669
      %v1790 = vunpack.c.l.b16 %v1681
      %v1791 = vunpack.c.l.b16 %v1693
      %v1792 = vunpack.c.l.b16 %v1705
      %v1793 = vunpack.c.l.b16 %v1717
      %v1794 = vunpack.c.l.b16 %v1729
      %v1795 = vunpack.c.l.b16 %v1741
      %v1796 = vunpack.c.l.b16 %v1753
      %v1797 = vunpack.c.l.b16 %v1765
      %v1798 = vpack.c.b16 %v1783, %v1782
      %v1799 = vpack.c.b16 %v1785, %v1784
      %v1800 = vpack.c.b16 %v1787, %v1786
      %v1801 = vpack.c.b16 %v1789, %v1788
      %v1802 = vpack.c.b16 %v1791, %v1790
      %v1803 = vpack.c.b16 %v1793, %v1792
      %v1804 = vpack.c.b16 %v1795, %v1794
      %v1805 = vpack.c.b16 %v1797, %v1796
      %v1814 = vadd.bf16 %v1542, %v1798
      %v1815 = vadd.bf16 %v1543, %v1798
      %v1816 = vadd.bf16 %v1544, %v1799
      %v1817 = vadd.bf16 %v1545, %v1799
      %v1818 = vadd.bf16 %v1546, %v1800
      %v1819 = vadd.bf16 %v1547, %v1800
      %v1820 = vadd.bf16 %v1548, %v1801
      %v1821 = vadd.bf16 %v1549, %v1801
      %v1822 = vadd.bf16 %v1550, %v1802
      %v1823 = vadd.bf16 %v1551, %v1802
      %v1824 = vadd.bf16 %v1552, %v1803
      %v1825 = vadd.bf16 %v1553, %v1803
      %v1826 = vadd.bf16 %v1554, %v1804
      %v1827 = vadd.bf16 %v1555, %v1804
      %v1828 = vadd.bf16 %v1556, %v1805
      %v1829 = vadd.bf16 %v1557, %v1805
      %v1830 = vmax.bf16 %v1814, 0
      %v1831 = vmax.bf16 %v1815, 0
      %v1832 = vmax.bf16 %v1816, 0
      %v1833 = vmax.bf16 %v1817, 0
      %v1834 = vmax.bf16 %v1818, 0
      %v1835 = vmax.bf16 %v1819, 0
      %v1836 = vmax.bf16 %v1820, 0
      %v1837 = vmax.bf16 %v1821, 0
      %v1838 = vmax.bf16 %v1822, 0
      %v1839 = vmax.bf16 %v1823, 0
      %v1840 = vmax.bf16 %v1824, 0
      %v1841 = vmax.bf16 %v1825, 0
      %v1842 = vmax.bf16 %v1826, 0
      %v1843 = vmax.bf16 %v1827, 0
      %v1844 = vmax.bf16 %v1828, 0
      %v1845 = vmax.bf16 %v1829, 0
      %v1846 = vld [vmem:[%s7] sm:$0xf]
      %v1847 = vld [vmem:[%s8] sm:$0xff]
      %1849 = vset.pattern.permute.xlu0 0
      %1850 = vperm.xlu0 %1849, %v1847
      %v1851 = vpop.permute.xlu0 %1850
      %1853 = vmatprep.subr.bf16.mxu0 %v1845
      %1854 = vmatpush1.bf16.msra.mxu0 %v1844
      %1855 = vmatprep.subr.bf16.mxu0 %v1843
      %1856 = vmatpush1.bf16.msra.mxu0 %v1842
      %1857 = vmatprep.subr.bf16.mxu0 %v1841
      %1858 = vmatpush1.bf16.msra.mxu0 %v1840
      %1859 = vmatprep.subr.bf16.mxu0 %v1839
      %1860 = vmatpush1.bf16.msra.mxu0 %v1838
      %1861 = vmatprep.subr.bf16.mxu0 %v1837
      %1862 = vmatpush1.bf16.msra.mxu0 %v1836
      %1863 = vmatprep.subr.bf16.mxu0 %v1835
      %1864 = vmatpush1.bf16.msra.mxu0 %v1834
      %1865 = vmatprep.subr.bf16.mxu0 %v1833
      %1866 = vmatpush1.bf16.msra.mxu0 %v1832
      %1867 = vmatprep.subr.bf16.mxu0 %v1831
      %1868 = vmatpush1.bf16.msra.mxu0 %v1830
      %1869 = vmatprep.subr.bf16.mxu0 0
      %1870 = vmatpush2.bf16.msra.mxu0 0
      %1871 = vmatprep.subr.bf16.mxu0 0
      %1872 = vmatpush2.bf16.msra.mxu0 0
      %1873 = vmatprep.subr.bf16.mxu0 0
      %1874 = vmatpush2.bf16.msra.mxu0 0
      %1875 = vmatprep.subr.bf16.mxu0 0
      %1876 = vmatpush2.bf16.msra.mxu0 0
      %1877 = vmatprep.subr.bf16.mxu0 0
      %1878 = vmatpush2.bf16.msra.mxu0 0
      %1879 = vmatprep.subr.bf16.mxu0 0
      %1880 = vmatpush2.bf16.msra.mxu0 0
      %1881 = vmatprep.subr.bf16.mxu0 0
      %1882 = vmatpush2.bf16.msra.mxu0 0
      %1883 = vmatprep.subr.bf16.mxu0 0
      %1884 = vmatpush2.bf16.msra.mxu0 0
      %1885 = vmatprep.mubr.bf16.mxu0 0
      %1886 = vmatmul.mubr.bf16.gmra.mxu0 %v1846
      %v1887 = vpop.f32.mrf.mxu0
      %v1888 = vadd.f32 %v1851, %v1887
      %v1889 = vpop.f32.mrf.mxu0
      %v1890 = vadd.f32 %v1851, %v1889
      %v1891 = vpop.f32.mrf.mxu0
      %v1892 = vpop.f32.mrf.mxu0
      %1893 = vdwg.mxu0
      %1894 = vst [vmem:[%s370] sm:$0xff] %v1888
      %1895 = vst [vmem:[%s370 + $0x8] sm:$0xff] %v1890
      %s1896 = smul.u32 2, %s25
      %p1897 = scmp.lt.s32.totalorder %s24, 1
      %s1898 = scalar_select %p1897, %s24, 1
      %p1899 = scmp.lt.s32.totalorder %s1896, 1
      %s1900 = scalar_select %p1899, %s1896, 1
      %s1901 = smul.addr %s1898, 2
      %s1902 = sadd.s32 %s1900, %s1901
      %s1903 = smul.addr %s1902, 8
      %s1904 = scalar_lea.vmem %s9, %s1903
      // Predicated region
      $region57: #{net_forward.1} parent=55 // pred_check
        %p1905 = pneg %p248
      $region58: #{net_forward.1} parent=55 // pred_check_branch
        %1907 = sbr.rel (%p1905) target = $region60
      $region59: #{net_forward.1} parent=55 // pred_region
        %s1908 = smul.u32 2, %s25
      $region60: #{net_forward.1} parent=55 // pred_fallthru
        _
    $region56: #{net_forward.1} parent=5 // pred_fallthru
      _
    %p1909 = scmp.le.s32.totalorder 2, %s15
    // Predicated region
    $region61: #{net_forward.1} parent=5 // pred_check
      %p1910 = pneg %p1909
    $region62: #{net_forward.1} parent=5 // pred_check_branch
      %1912 = sbr.rel (%p1910) target = $region64
    $region63: #{net_forward.1} parent=5 // pred_region
      %s1913 = ssub.s32 %s15, 2
      // Predicated region
      $region65: #{net_forward.1} parent=63 // pred_check
        %p1914 = pneg %p254
      $region66: #{net_forward.1} parent=63 // pred_check_branch
        %1916 = sbr.rel (%p1914) target = $region68
      $region67: #{net_forward.1} parent=63 // pred_region
        %s1917 = smul.u32 2, %s27
        %p1918 = scmp.lt.s32.totalorder %s26, 1
        %s1919 = scalar_select %p1918, %s26, 1
        %p1920 = scmp.lt.s32.totalorder %s1917, 1
        %s1921 = scalar_select %p1920, %s1917, 1
        %s1922 = smul.addr %s1919, 2
        %s1923 = sadd.s32 %s1921, %s1922
        %s1924 = smul.addr %s1923, 8
        %s1925 = scalar_lea.vmem %s9, %s1924
      $region68: #{net_forward.1} parent=63 // pred_fallthru
        _
    $region64: #{net_forward.1} parent=5 // pred_fallthru
      _
  $region6: #{net_forward.1} parent=0 // loop_footer
    %s19 = sadd.s32 1, %s15
  $region7: #{net_forward.1} parent=0 // loop_footer_branch
    %14 = sbr.rel target = $region3
  $region8: #{net_forward.1} parent=0 // loop_exit
    _

</llo_original>
